<compile_context>
chip_gen: v7x
topology: tpu7x:2x2x1
jax: 0.10.0
libtpu: 0.0.40
codegen_flags: <defaults>
</compile_context>

<pallas_src>
import math

import jax
import jax.numpy as jnp
from jax import lax
from jax.experimental import pallas as pl
from jax.experimental.pallas import tpu as pltpu


def _mha_kernel(x_ref, wq_ref, bq_ref, wk_ref, bk_ref, wv_ref, bv_ref,
                wo_ref, bo_ref, o_ref):
    # x_ref : (1, S, E) tile (one batch element per grid step)
    # wq/wk/wv : (H, E, hd)   bq/bk/bv : (H, 1, hd)
    # wo : (H, hd, E)         bo : (1, E)
    x = x_ref[0].astype(jnp.float32)                         # (S, E)
    num_heads, _, head_dim = wq_ref.shape
    scale = 1.0 / math.sqrt(head_dim)

    seq = x.shape[0]
    e_out = o_ref.shape[-1]
    acc = jnp.zeros((seq, e_out), jnp.float32)

    # num_heads is small & static -> unrolled; every matmul hits the MXU with f32 acc.
    for h in range(num_heads):
        q = jnp.dot(x, wq_ref[h], preferred_element_type=jnp.float32) + bq_ref[h]
        k = jnp.dot(x, wk_ref[h], preferred_element_type=jnp.float32) + bk_ref[h]
        v = jnp.dot(x, wv_ref[h], preferred_element_type=jnp.float32) + bv_ref[h]
        # scores = q @ k^T / sqrt(head_dim)   (contraction on dim 1, no explicit transpose)
        s = lax.dot_general(q, k, (((1,), (1,)), ((), ())),
                            preferred_element_type=jnp.float32) * scale      # (S, S)
        s = s - jnp.max(s, axis=-1, keepdims=True)
        p = jnp.exp(s)
        p = p / jnp.sum(p, axis=-1, keepdims=True)
        o_h = jnp.dot(p, v, preferred_element_type=jnp.float32)              # (S, hd)
        # concat + output projection fused: out = sum_h o_h @ Wo[h]
        acc = acc + jnp.dot(o_h, wo_ref[h], preferred_element_type=jnp.float32)

    o_ref[0] = (acc + bo_ref[...]).astype(o_ref.dtype)


def multi_head_attention(x, wq, bq, wk, bk, wv, bv, wo, bo):
    """x: (B, S, E); wq/wk/wv: (H, E, hd); bq/bk/bv: (H, 1, hd); wo: (H, hd, E); bo: (1, E)."""
    B, S, E = x.shape
    H, E2, hd = wq.shape
    assert E2 == E and H * hd == E

    # TODO(synk): for long sequences, add a query-tile grid axis with a
    # flash-style online softmax instead of holding the full (S, S) scores.
    return pl.pallas_call(
        _mha_kernel,
        out_shape=jax.ShapeDtypeStruct((B, S, E), x.dtype),
        grid=(B,),
        in_specs=[
            pl.BlockSpec((1, S, E), lambda b: (b, 0, 0)),    # x: one batch row / step
            pl.BlockSpec((H, E, hd), lambda b: (0, 0, 0)),   # wq (VMEM-resident)
            pl.BlockSpec((H, 1, hd), lambda b: (0, 0, 0)),   # bq
            pl.BlockSpec((H, E, hd), lambda b: (0, 0, 0)),   # wk
            pl.BlockSpec((H, 1, hd), lambda b: (0, 0, 0)),   # bk
            pl.BlockSpec((H, E, hd), lambda b: (0, 0, 0)),   # wv
            pl.BlockSpec((H, 1, hd), lambda b: (0, 0, 0)),   # bv
            pl.BlockSpec((H, hd, E), lambda b: (0, 0, 0)),   # wo
            pl.BlockSpec((1, E), lambda b: (0, 0)),          # bo
        ],
        out_specs=pl.BlockSpec((1, S, E), lambda b: (b, 0, 0)),
        compiler_params=pltpu.CompilerParams(
            dimension_semantics=("parallel",),   # batch axis can shard across TCs (v7x)
        ),
    )(x, wq, bq, wk, bk, wv, bv, wo, bo)


if __name__ == "__main__":
    # Config-equivalent: embedding_dimensions=32, num_attention_heads=4 -> head_dim=8
    B, S, E, H = 2, 8, 32, 4
    hd = E // H

    key = jax.random.PRNGKey(0)
    kx, kq, kbq, kk, kbk, kv, kbv, ko, kbo = jax.random.split(key, 9)
    wscale = 1.0 / math.sqrt(E)

    x = jax.random.normal(kx, (B, S, E), dtype=jnp.float32)
    wq = jax.random.normal(kq, (H, E, hd), jnp.float32) * wscale
    bq = jax.random.normal(kbq, (H, 1, hd), jnp.float32) * 0.02
    wk = jax.random.normal(kk, (H, E, hd), jnp.float32) * wscale
    bk = jax.random.normal(kbk, (H, 1, hd), jnp.float32) * 0.02
    wv = jax.random.normal(kv, (H, E, hd), jnp.float32) * wscale
    bv = jax.random.normal(kbv, (H, 1, hd), jnp.float32) * 0.02
    wo = jax.random.normal(ko, (H, hd, E), jnp.float32) * wscale
    bo = jax.random.normal(kbo, (1, E), jnp.float32) * 0.02

    out = multi_head_attention(x, wq, bq, wk, bk, wv, bv, wo, bo)
    out = jax.block_until_ready(out)

    # Pure-JAX reference: identical math to the PyTorch MultiHeadAttention module.
    def ref_fn(x):
        heads = []
        for h in range(H):
            q = x @ wq[h] + bq[h]
            k = x @ wk[h] + bk[h]
            v = x @ wv[h] + bv[h]
            s = jnp.einsum("bqd,bkd->bqk", q, k) / math.sqrt(hd)
            p = jax.nn.softmax(s, axis=-1)
            heads.append(jnp.einsum("bqk,bkd->bqd", p, v))
        cat = jnp.concatenate(heads, axis=-1)            # (B, S, E)
        return cat @ wo.reshape(E, E) + bo               # output_linear

    ref = ref_fn(x)
    assert jnp.allclose(out, ref, atol=2e-2, rtol=2e-2), (
        f"mismatch vs reference: max abs diff {jnp.max(jnp.abs(out - ref))}")

    print("KERNEL_OK")
</pallas_src>

<mosaic_0001>
module attributes {stable_mosaic.version = 11 : i64} {
  func.func @_mha_kernel(%arg0: i32, %arg1: memref<1x8x32xf32, #tpu.memory_space<vmem>>, %arg2: memref<4x32x8xf32, #tpu.memory_space<vmem>>, %arg3: memref<4x1x8xf32, #tpu.memory_space<vmem>>, %arg4: memref<4x32x8xf32, #tpu.memory_space<vmem>>, %arg5: memref<4x1x8xf32, #tpu.memory_space<vmem>>, %arg6: memref<4x32x8xf32, #tpu.memory_space<vmem>>, %arg7: memref<4x1x8xf32, #tpu.memory_space<vmem>>, %arg8: memref<4x8x32xf32, #tpu.memory_space<vmem>>, %arg9: memref<1x32xf32, #tpu.memory_space<vmem>>, %arg10: memref<1x8x32xf32, #tpu.memory_space<vmem>>) attributes {dimension_semantics = [#tpu.dimension_semantics<parallel>], iteration_bounds = array<i64: 2>, scalar_prefetch = 0 : i64, scratch_operands = 0 : i64, tpu.core_type = #tpu.core_type<tc>, window_params = [{transform_indices = @transform_0, window_bounds = array<i64: 1, 8, 32>}, {pipeline_mode = #tpu.pipeline_mode<synchronous>, transform_indices = @transform_1, window_bounds = array<i64: 4, 32, 8>}, {pipeline_mode = #tpu.pipeline_mode<synchronous>, transform_indices = @transform_2, window_bounds = array<i64: 4, 1, 8>}, {pipeline_mode = #tpu.pipeline_mode<synchronous>, transform_indices = @transform_3, window_bounds = array<i64: 4, 32, 8>}, {pipeline_mode = #tpu.pipeline_mode<synchronous>, transform_indices = @transform_4, window_bounds = array<i64: 4, 1, 8>}, {pipeline_mode = #tpu.pipeline_mode<synchronous>, transform_indices = @transform_5, window_bounds = array<i64: 4, 32, 8>}, {pipeline_mode = #tpu.pipeline_mode<synchronous>, transform_indices = @transform_6, window_bounds = array<i64: 4, 1, 8>}, {pipeline_mode = #tpu.pipeline_mode<synchronous>, transform_indices = @transform_7, window_bounds = array<i64: 4, 8, 32>}, {pipeline_mode = #tpu.pipeline_mode<synchronous>, transform_indices = @transform_8, window_bounds = array<i64: 1, 32>}, {transform_indices = @transform_9, window_bounds = array<i64: 1, 8, 32>}]} {
    %c0 = arith.constant 0 : index
    %c0_0 = arith.constant 0 : index
    %c0_1 = arith.constant 0 : index
    %0 = vector.load %arg1[%c0, %c0_0, %c0_1] : memref<1x8x32xf32, #tpu.memory_space<vmem>>, vector<1x8x32xf32>
    %1 = vector.shape_cast %0 : vector<1x8x32xf32> to vector<8x32xf32>
    %cst = arith.constant 0.000000e+00 : f32
    %2 = vector.broadcast %cst : f32 to vector<8x32xf32>
    %c0_2 = arith.constant 0 : index
    %c0_3 = arith.constant 0 : index
    %c0_4 = arith.constant 0 : index
    %3 = vector.load %arg2[%c0_2, %c0_3, %c0_4] : memref<4x32x8xf32, #tpu.memory_space<vmem>>, vector<1x32x8xf32>
    %4 = vector.shape_cast %3 : vector<1x32x8xf32> to vector<32x8xf32>
    %cst_5 = arith.constant dense<0.000000e+00> : vector<8x8xf32>
    %5 = tpu.matmul %1, %4, %cst_5 {dimension_numbers = #tpu.dot_dimension_numbers<[1], [0], [0], [1], [0, 0, 1, 1], [], []>} : vector<8x32xf32>, vector<32x8xf32>, vector<8x8xf32> -> vector<8x8xf32>
    %c0_6 = arith.constant 0 : index
    %c0_7 = arith.constant 0 : index
    %c0_8 = arith.constant 0 : index
    %6 = vector.load %arg3[%c0_6, %c0_7, %c0_8] : memref<4x1x8xf32, #tpu.memory_space<vmem>>, vector<1x1x8xf32>
    %7 = vector.shape_cast %6 : vector<1x1x8xf32> to vector<1x8xf32>
    %8 = vector.broadcast %7 : vector<1x8xf32> to vector<8x8xf32>
    %9 = arith.addf %5, %8 : vector<8x8xf32>
    %c0_9 = arith.constant 0 : index
    %c0_10 = arith.constant 0 : index
    %c0_11 = arith.constant 0 : index
    %10 = vector.load %arg4[%c0_9, %c0_10, %c0_11] : memref<4x32x8xf32, #tpu.memory_space<vmem>>, vector<1x32x8xf32>
    %11 = vector.shape_cast %10 : vector<1x32x8xf32> to vector<32x8xf32>
    %cst_12 = arith.constant dense<0.000000e+00> : vector<8x8xf32>
    %12 = tpu.matmul %1, %11, %cst_12 {dimension_numbers = #tpu.dot_dimension_numbers<[1], [0], [0], [1], [0, 0, 1, 1], [], []>} : vector<8x32xf32>, vector<32x8xf32>, vector<8x8xf32> -> vector<8x8xf32>
    %c0_13 = arith.constant 0 : index
    %c0_14 = arith.constant 0 : index
    %c0_15 = arith.constant 0 : index
    %13 = vector.load %arg5[%c0_13, %c0_14, %c0_15] : memref<4x1x8xf32, #tpu.memory_space<vmem>>, vector<1x1x8xf32>
    %14 = vector.shape_cast %13 : vector<1x1x8xf32> to vector<1x8xf32>
    %15 = vector.broadcast %14 : vector<1x8xf32> to vector<8x8xf32>
    %16 = arith.addf %12, %15 : vector<8x8xf32>
    %c0_16 = arith.constant 0 : index
    %c0_17 = arith.constant 0 : index
    %c0_18 = arith.constant 0 : index
    %17 = vector.load %arg6[%c0_16, %c0_17, %c0_18] : memref<4x32x8xf32, #tpu.memory_space<vmem>>, vector<1x32x8xf32>
    %18 = vector.shape_cast %17 : vector<1x32x8xf32> to vector<32x8xf32>
    %cst_19 = arith.constant dense<0.000000e+00> : vector<8x8xf32>
    %19 = tpu.matmul %1, %18, %cst_19 {dimension_numbers = #tpu.dot_dimension_numbers<[1], [0], [0], [1], [0, 0, 1, 1], [], []>} : vector<8x32xf32>, vector<32x8xf32>, vector<8x8xf32> -> vector<8x8xf32>
    %c0_20 = arith.constant 0 : index
    %c0_21 = arith.constant 0 : index
    %c0_22 = arith.constant 0 : index
    %20 = vector.load %arg7[%c0_20, %c0_21, %c0_22] : memref<4x1x8xf32, #tpu.memory_space<vmem>>, vector<1x1x8xf32>
    %21 = vector.shape_cast %20 : vector<1x1x8xf32> to vector<1x8xf32>
    %22 = vector.broadcast %21 : vector<1x8xf32> to vector<8x8xf32>
    %23 = arith.addf %19, %22 : vector<8x8xf32>
    %cst_23 = arith.constant dense<0.000000e+00> : vector<8x8xf32>
    %24 = tpu.matmul %9, %16, %cst_23 {dimension_numbers = #tpu.dot_dimension_numbers<[1], [1], [0], [0], [0, 0, 1, 0], [], []>} : vector<8x8xf32>, vector<8x8xf32>, vector<8x8xf32> -> vector<8x8xf32>
    %cst_24 = arith.constant 0.353553385 : f32
    %25 = vector.broadcast %cst_24 : f32 to vector<8x8xf32>
    %26 = arith.mulf %24, %25 : vector<8x8xf32>
    %cst_25 = arith.constant dense<0xFF800000> : vector<8xf32>
    %27 = vector.multi_reduction <maximumf>, %26, %cst_25 [1] : vector<8x8xf32> to vector<8xf32>
    %28 = vector.shape_cast %27 : vector<8xf32> to vector<8x1xf32>
    %29 = vector.broadcast %28 : vector<8x1xf32> to vector<8x8xf32>
    %30 = arith.subf %26, %29 : vector<8x8xf32>
    %31 = math.exp %30 : vector<8x8xf32>
    %cst_26 = arith.constant dense<0.000000e+00> : vector<8xf32>
    %32 = vector.multi_reduction <add>, %31, %cst_26 [1] : vector<8x8xf32> to vector<8xf32>
    %33 = vector.shape_cast %32 : vector<8xf32> to vector<8x1xf32>
    %34 = vector.broadcast %33 : vector<8x1xf32> to vector<8x8xf32>
    %35 = arith.divf %31, %34 : vector<8x8xf32>
    %cst_27 = arith.constant dense<0.000000e+00> : vector<8x8xf32>
    %36 = tpu.matmul %35, %23, %cst_27 {dimension_numbers = #tpu.dot_dimension_numbers<[1], [0], [0], [1], [0, 0, 1, 1], [], []>} : vector<8x8xf32>, vector<8x8xf32>, vector<8x8xf32> -> vector<8x8xf32>
    %c0_28 = arith.constant 0 : index
    %c0_29 = arith.constant 0 : index
    %c0_30 = arith.constant 0 : index
    %37 = vector.load %arg8[%c0_28, %c0_29, %c0_30] : memref<4x8x32xf32, #tpu.memory_space<vmem>>, vector<1x8x32xf32>
    %38 = vector.shape_cast %37 : vector<1x8x32xf32> to vector<8x32xf32>
    %cst_31 = arith.constant dense<0.000000e+00> : vector<8x32xf32>
    %39 = tpu.matmul %36, %38, %cst_31 {dimension_numbers = #tpu.dot_dimension_numbers<[1], [0], [0], [1], [0, 0, 1, 1], [], []>} : vector<8x8xf32>, vector<8x32xf32>, vector<8x32xf32> -> vector<8x32xf32>
    %40 = arith.addf %2, %39 : vector<8x32xf32>
    %c1 = arith.constant 1 : index
    %c0_32 = arith.constant 0 : index
    %c0_33 = arith.constant 0 : index
    %41 = vector.load %arg2[%c1, %c0_32, %c0_33] : memref<4x32x8xf32, #tpu.memory_space<vmem>>, vector<1x32x8xf32>
    %42 = vector.shape_cast %41 : vector<1x32x8xf32> to vector<32x8xf32>
    %cst_34 = arith.constant dense<0.000000e+00> : vector<8x8xf32>
    %43 = tpu.matmul %1, %42, %cst_34 {dimension_numbers = #tpu.dot_dimension_numbers<[1], [0], [0], [1], [0, 0, 1, 1], [], []>} : vector<8x32xf32>, vector<32x8xf32>, vector<8x8xf32> -> vector<8x8xf32>
    %c1_35 = arith.constant 1 : index
    %c0_36 = arith.constant 0 : index
    %c0_37 = arith.constant 0 : index
    %44 = vector.load %arg3[%c1_35, %c0_36, %c0_37] : memref<4x1x8xf32, #tpu.memory_space<vmem>>, vector<1x1x8xf32>
    %45 = vector.shape_cast %44 : vector<1x1x8xf32> to vector<1x8xf32>
    %46 = vector.broadcast %45 : vector<1x8xf32> to vector<8x8xf32>
    %47 = arith.addf %43, %46 : vector<8x8xf32>
    %c1_38 = arith.constant 1 : index
    %c0_39 = arith.constant 0 : index
    %c0_40 = arith.constant 0 : index
    %48 = vector.load %arg4[%c1_38, %c0_39, %c0_40] : memref<4x32x8xf32, #tpu.memory_space<vmem>>, vector<1x32x8xf32>
    %49 = vector.shape_cast %48 : vector<1x32x8xf32> to vector<32x8xf32>
    %cst_41 = arith.constant dense<0.000000e+00> : vector<8x8xf32>
    %50 = tpu.matmul %1, %49, %cst_41 {dimension_numbers = #tpu.dot_dimension_numbers<[1], [0], [0], [1], [0, 0, 1, 1], [], []>} : vector<8x32xf32>, vector<32x8xf32>, vector<8x8xf32> -> vector<8x8xf32>
    %c1_42 = arith.constant 1 : index
    %c0_43 = arith.constant 0 : index
    %c0_44 = arith.constant 0 : index
    %51 = vector.load %arg5[%c1_42, %c0_43, %c0_44] : memref<4x1x8xf32, #tpu.memory_space<vmem>>, vector<1x1x8xf32>
    %52 = vector.shape_cast %51 : vector<1x1x8xf32> to vector<1x8xf32>
    %53 = vector.broadcast %52 : vector<1x8xf32> to vector<8x8xf32>
    %54 = arith.addf %50, %53 : vector<8x8xf32>
    %c1_45 = arith.constant 1 : index
    %c0_46 = arith.constant 0 : index
    %c0_47 = arith.constant 0 : index
    %55 = vector.load %arg6[%c1_45, %c0_46, %c0_47] : memref<4x32x8xf32, #tpu.memory_space<vmem>>, vector<1x32x8xf32>
    %56 = vector.shape_cast %55 : vector<1x32x8xf32> to vector<32x8xf32>
    %cst_48 = arith.constant dense<0.000000e+00> : vector<8x8xf32>
    %57 = tpu.matmul %1, %56, %cst_48 {dimension_numbers = #tpu.dot_dimension_numbers<[1], [0], [0], [1], [0, 0, 1, 1], [], []>} : vector<8x32xf32>, vector<32x8xf32>, vector<8x8xf32> -> vector<8x8xf32>
    %c1_49 = arith.constant 1 : index
    %c0_50 = arith.constant 0 : index
    %c0_51 = arith.constant 0 : index
    %58 = vector.load %arg7[%c1_49, %c0_50, %c0_51] : memref<4x1x8xf32, #tpu.memory_space<vmem>>, vector<1x1x8xf32>
    %59 = vector.shape_cast %58 : vector<1x1x8xf32> to vector<1x8xf32>
    %60 = vector.broadcast %59 : vector<1x8xf32> to vector<8x8xf32>
    %61 = arith.addf %57, %60 : vector<8x8xf32>
    %cst_52 = arith.constant dense<0.000000e+00> : vector<8x8xf32>
    %62 = tpu.matmul %47, %54, %cst_52 {dimension_numbers = #tpu.dot_dimension_numbers<[1], [1], [0], [0], [0, 0, 1, 0], [], []>} : vector<8x8xf32>, vector<8x8xf32>, vector<8x8xf32> -> vector<8x8xf32>
    %cst_53 = arith.constant 0.353553385 : f32
    %63 = vector.broadcast %cst_53 : f32 to vector<8x8xf32>
    %64 = arith.mulf %62, %63 : vector<8x8xf32>
    %cst_54 = arith.constant dense<0xFF800000> : vector<8xf32>
    %65 = vector.multi_reduction <maximumf>, %64, %cst_54 [1] : vector<8x8xf32> to vector<8xf32>
    %66 = vector.shape_cast %65 : vector<8xf32> to vector<8x1xf32>
    %67 = vector.broadcast %66 : vector<8x1xf32> to vector<8x8xf32>
    %68 = arith.subf %64, %67 : vector<8x8xf32>
    %69 = math.exp %68 : vector<8x8xf32>
    %cst_55 = arith.constant dense<0.000000e+00> : vector<8xf32>
    %70 = vector.multi_reduction <add>, %69, %cst_55 [1] : vector<8x8xf32> to vector<8xf32>
    %71 = vector.shape_cast %70 : vector<8xf32> to vector<8x1xf32>
    %72 = vector.broadcast %71 : vector<8x1xf32> to vector<8x8xf32>
    %73 = arith.divf %69, %72 : vector<8x8xf32>
    %cst_56 = arith.constant dense<0.000000e+00> : vector<8x8xf32>
    %74 = tpu.matmul %73, %61, %cst_56 {dimension_numbers = #tpu.dot_dimension_numbers<[1], [0], [0], [1], [0, 0, 1, 1], [], []>} : vector<8x8xf32>, vector<8x8xf32>, vector<8x8xf32> -> vector<8x8xf32>
    %c1_57 = arith.constant 1 : index
    %c0_58 = arith.constant 0 : index
    %c0_59 = arith.constant 0 : index
    %75 = vector.load %arg8[%c1_57, %c0_58, %c0_59] : memref<4x8x32xf32, #tpu.memory_space<vmem>>, vector<1x8x32xf32>
    %76 = vector.shape_cast %75 : vector<1x8x32xf32> to vector<8x32xf32>
    %cst_60 = arith.constant dense<0.000000e+00> : vector<8x32xf32>
    %77 = tpu.matmul %74, %76, %cst_60 {dimension_numbers = #tpu.dot_dimension_numbers<[1], [0], [0], [1], [0, 0, 1, 1], [], []>} : vector<8x8xf32>, vector<8x32xf32>, vector<8x32xf32> -> vector<8x32xf32>
    %78 = arith.addf %40, %77 : vector<8x32xf32>
    %c2 = arith.constant 2 : index
    %c0_61 = arith.constant 0 : index
    %c0_62 = arith.constant 0 : index
    %79 = vector.load %arg2[%c2, %c0_61, %c0_62] : memref<4x32x8xf32, #tpu.memory_space<vmem>>, vector<1x32x8xf32>
    %80 = vector.shape_cast %79 : vector<1x32x8xf32> to vector<32x8xf32>
    %cst_63 = arith.constant dense<0.000000e+00> : vector<8x8xf32>
    %81 = tpu.matmul %1, %80, %cst_63 {dimension_numbers = #tpu.dot_dimension_numbers<[1], [0], [0], [1], [0, 0, 1, 1], [], []>} : vector<8x32xf32>, vector<32x8xf32>, vector<8x8xf32> -> vector<8x8xf32>
    %c2_64 = arith.constant 2 : index
    %c0_65 = arith.constant 0 : index
    %c0_66 = arith.constant 0 : index
    %82 = vector.load %arg3[%c2_64, %c0_65, %c0_66] : memref<4x1x8xf32, #tpu.memory_space<vmem>>, vector<1x1x8xf32>
    %83 = vector.shape_cast %82 : vector<1x1x8xf32> to vector<1x8xf32>
    %84 = vector.broadcast %83 : vector<1x8xf32> to vector<8x8xf32>
    %85 = arith.addf %81, %84 : vector<8x8xf32>
    %c2_67 = arith.constant 2 : index
    %c0_68 = arith.constant 0 : index
    %c0_69 = arith.constant 0 : index
    %86 = vector.load %arg4[%c2_67, %c0_68, %c0_69] : memref<4x32x8xf32, #tpu.memory_space<vmem>>, vector<1x32x8xf32>
    %87 = vector.shape_cast %86 : vector<1x32x8xf32> to vector<32x8xf32>
    %cst_70 = arith.constant dense<0.000000e+00> : vector<8x8xf32>
    %88 = tpu.matmul %1, %87, %cst_70 {dimension_numbers = #tpu.dot_dimension_numbers<[1], [0], [0], [1], [0, 0, 1, 1], [], []>} : vector<8x32xf32>, vector<32x8xf32>, vector<8x8xf32> -> vector<8x8xf32>
    %c2_71 = arith.constant 2 : index
    %c0_72 = arith.constant 0 : index
    %c0_73 = arith.constant 0 : index
    %89 = vector.load %arg5[%c2_71, %c0_72, %c0_73] : memref<4x1x8xf32, #tpu.memory_space<vmem>>, vector<1x1x8xf32>
    %90 = vector.shape_cast %89 : vector<1x1x8xf32> to vector<1x8xf32>
    %91 = vector.broadcast %90 : vector<1x8xf32> to vector<8x8xf32>
    %92 = arith.addf %88, %91 : vector<8x8xf32>
    %c2_74 = arith.constant 2 : index
    %c0_75 = arith.constant 0 : index
    %c0_76 = arith.constant 0 : index
    %93 = vector.load %arg6[%c2_74, %c0_75, %c0_76] : memref<4x32x8xf32, #tpu.memory_space<vmem>>, vector<1x32x8xf32>
    %94 = vector.shape_cast %93 : vector<1x32x8xf32> to vector<32x8xf32>
    %cst_77 = arith.constant dense<0.000000e+00> : vector<8x8xf32>
    %95 = tpu.matmul %1, %94, %cst_77 {dimension_numbers = #tpu.dot_dimension_numbers<[1], [0], [0], [1], [0, 0, 1, 1], [], []>} : vector<8x32xf32>, vector<32x8xf32>, vector<8x8xf32> -> vector<8x8xf32>
    %c2_78 = arith.constant 2 : index
    %c0_79 = arith.constant 0 : index
    %c0_80 = arith.constant 0 : index
    %96 = vector.load %arg7[%c2_78, %c0_79, %c0_80] : memref<4x1x8xf32, #tpu.memory_space<vmem>>, vector<1x1x8xf32>
    %97 = vector.shape_cast %96 : vector<1x1x8xf32> to vector<1x8xf32>
    %98 = vector.broadcast %97 : vector<1x8xf32> to vector<8x8xf32>
    %99 = arith.addf %95, %98 : vector<8x8xf32>
    %cst_81 = arith.constant dense<0.000000e+00> : vector<8x8xf32>
    %100 = tpu.matmul %85, %92, %cst_81 {dimension_numbers = #tpu.dot_dimension_numbers<[1], [1], [0], [0], [0, 0, 1, 0], [], []>} : vector<8x8xf32>, vector<8x8xf32>, vector<8x8xf32> -> vector<8x8xf32>
    %cst_82 = arith.constant 0.353553385 : f32
    %101 = vector.broadcast %cst_82 : f32 to vector<8x8xf32>
    %102 = arith.mulf %100, %101 : vector<8x8xf32>
    %cst_83 = arith.constant dense<0xFF800000> : vector<8xf32>
    %103 = vector.multi_reduction <maximumf>, %102, %cst_83 [1] : vector<8x8xf32> to vector<8xf32>
    %104 = vector.shape_cast %103 : vector<8xf32> to vector<8x1xf32>
    %105 = vector.broadcast %104 : vector<8x1xf32> to vector<8x8xf32>
    %106 = arith.subf %102, %105 : vector<8x8xf32>
    %107 = math.exp %106 : vector<8x8xf32>
    %cst_84 = arith.constant dense<0.000000e+00> : vector<8xf32>
    %108 = vector.multi_reduction <add>, %107, %cst_84 [1] : vector<8x8xf32> to vector<8xf32>
    %109 = vector.shape_cast %108 : vector<8xf32> to vector<8x1xf32>
    %110 = vector.broadcast %109 : vector<8x1xf32> to vector<8x8xf32>
    %111 = arith.divf %107, %110 : vector<8x8xf32>
    %cst_85 = arith.constant dense<0.000000e+00> : vector<8x8xf32>
    %112 = tpu.matmul %111, %99, %cst_85 {dimension_numbers = #tpu.dot_dimension_numbers<[1], [0], [0], [1], [0, 0, 1, 1], [], []>} : vector<8x8xf32>, vector<8x8xf32>, vector<8x8xf32> -> vector<8x8xf32>
    %c2_86 = arith.constant 2 : index
    %c0_87 = arith.constant 0 : index
    %c0_88 = arith.constant 0 : index
    %113 = vector.load %arg8[%c2_86, %c0_87, %c0_88] : memref<4x8x32xf32, #tpu.memory_space<vmem>>, vector<1x8x32xf32>
    %114 = vector.shape_cast %113 : vector<1x8x32xf32> to vector<8x32xf32>
    %cst_89 = arith.constant dense<0.000000e+00> : vector<8x32xf32>
    %115 = tpu.matmul %112, %114, %cst_89 {dimension_numbers = #tpu.dot_dimension_numbers<[1], [0], [0], [1], [0, 0, 1, 1], [], []>} : vector<8x8xf32>, vector<8x32xf32>, vector<8x32xf32> -> vector<8x32xf32>
    %116 = arith.addf %78, %115 : vector<8x32xf32>
    %c3 = arith.constant 3 : index
    %c0_90 = arith.constant 0 : index
    %c0_91 = arith.constant 0 : index
    %117 = vector.load %arg2[%c3, %c0_90, %c0_91] : memref<4x32x8xf32, #tpu.memory_space<vmem>>, vector<1x32x8xf32>
    %118 = vector.shape_cast %117 : vector<1x32x8xf32> to vector<32x8xf32>
    %cst_92 = arith.constant dense<0.000000e+00> : vector<8x8xf32>
    %119 = tpu.matmul %1, %118, %cst_92 {dimension_numbers = #tpu.dot_dimension_numbers<[1], [0], [0], [1], [0, 0, 1, 1], [], []>} : vector<8x32xf32>, vector<32x8xf32>, vector<8x8xf32> -> vector<8x8xf32>
    %c3_93 = arith.constant 3 : index
    %c0_94 = arith.constant 0 : index
    %c0_95 = arith.constant 0 : index
    %120 = vector.load %arg3[%c3_93, %c0_94, %c0_95] : memref<4x1x8xf32, #tpu.memory_space<vmem>>, vector<1x1x8xf32>
    %121 = vector.shape_cast %120 : vector<1x1x8xf32> to vector<1x8xf32>
    %122 = vector.broadcast %121 : vector<1x8xf32> to vector<8x8xf32>
    %123 = arith.addf %119, %122 : vector<8x8xf32>
    %c3_96 = arith.constant 3 : index
    %c0_97 = arith.constant 0 : index
    %c0_98 = arith.constant 0 : index
    %124 = vector.load %arg4[%c3_96, %c0_97, %c0_98] : memref<4x32x8xf32, #tpu.memory_space<vmem>>, vector<1x32x8xf32>
    %125 = vector.shape_cast %124 : vector<1x32x8xf32> to vector<32x8xf32>
    %cst_99 = arith.constant dense<0.000000e+00> : vector<8x8xf32>
    %126 = tpu.matmul %1, %125, %cst_99 {dimension_numbers = #tpu.dot_dimension_numbers<[1], [0], [0], [1], [0, 0, 1, 1], [], []>} : vector<8x32xf32>, vector<32x8xf32>, vector<8x8xf32> -> vector<8x8xf32>
    %c3_100 = arith.constant 3 : index
    %c0_101 = arith.constant 0 : index
    %c0_102 = arith.constant 0 : index
    %127 = vector.load %arg5[%c3_100, %c0_101, %c0_102] : memref<4x1x8xf32, #tpu.memory_space<vmem>>, vector<1x1x8xf32>
    %128 = vector.shape_cast %127 : vector<1x1x8xf32> to vector<1x8xf32>
    %129 = vector.broadcast %128 : vector<1x8xf32> to vector<8x8xf32>
    %130 = arith.addf %126, %129 : vector<8x8xf32>
    %c3_103 = arith.constant 3 : index
    %c0_104 = arith.constant 0 : index
    %c0_105 = arith.constant 0 : index
    %131 = vector.load %arg6[%c3_103, %c0_104, %c0_105] : memref<4x32x8xf32, #tpu.memory_space<vmem>>, vector<1x32x8xf32>
    %132 = vector.shape_cast %131 : vector<1x32x8xf32> to vector<32x8xf32>
    %cst_106 = arith.constant dense<0.000000e+00> : vector<8x8xf32>
    %133 = tpu.matmul %1, %132, %cst_106 {dimension_numbers = #tpu.dot_dimension_numbers<[1], [0], [0], [1], [0, 0, 1, 1], [], []>} : vector<8x32xf32>, vector<32x8xf32>, vector<8x8xf32> -> vector<8x8xf32>
    %c3_107 = arith.constant 3 : index
    %c0_108 = arith.constant 0 : index
    %c0_109 = arith.constant 0 : index
    %134 = vector.load %arg7[%c3_107, %c0_108, %c0_109] : memref<4x1x8xf32, #tpu.memory_space<vmem>>, vector<1x1x8xf32>
    %135 = vector.shape_cast %134 : vector<1x1x8xf32> to vector<1x8xf32>
    %136 = vector.broadcast %135 : vector<1x8xf32> to vector<8x8xf32>
    %137 = arith.addf %133, %136 : vector<8x8xf32>
    %cst_110 = arith.constant dense<0.000000e+00> : vector<8x8xf32>
    %138 = tpu.matmul %123, %130, %cst_110 {dimension_numbers = #tpu.dot_dimension_numbers<[1], [1], [0], [0], [0, 0, 1, 0], [], []>} : vector<8x8xf32>, vector<8x8xf32>, vector<8x8xf32> -> vector<8x8xf32>
    %cst_111 = arith.constant 0.353553385 : f32
    %139 = vector.broadcast %cst_111 : f32 to vector<8x8xf32>
    %140 = arith.mulf %138, %139 : vector<8x8xf32>
    %cst_112 = arith.constant dense<0xFF800000> : vector<8xf32>
    %141 = vector.multi_reduction <maximumf>, %140, %cst_112 [1] : vector<8x8xf32> to vector<8xf32>
    %142 = vector.shape_cast %141 : vector<8xf32> to vector<8x1xf32>
    %143 = vector.broadcast %142 : vector<8x1xf32> to vector<8x8xf32>
    %144 = arith.subf %140, %143 : vector<8x8xf32>
    %145 = math.exp %144 : vector<8x8xf32>
    %cst_113 = arith.constant dense<0.000000e+00> : vector<8xf32>
    %146 = vector.multi_reduction <add>, %145, %cst_113 [1] : vector<8x8xf32> to vector<8xf32>
    %147 = vector.shape_cast %146 : vector<8xf32> to vector<8x1xf32>
    %148 = vector.broadcast %147 : vector<8x1xf32> to vector<8x8xf32>
    %149 = arith.divf %145, %148 : vector<8x8xf32>
    %cst_114 = arith.constant dense<0.000000e+00> : vector<8x8xf32>
    %150 = tpu.matmul %149, %137, %cst_114 {dimension_numbers = #tpu.dot_dimension_numbers<[1], [0], [0], [1], [0, 0, 1, 1], [], []>} : vector<8x8xf32>, vector<8x8xf32>, vector<8x8xf32> -> vector<8x8xf32>
    %c3_115 = arith.constant 3 : index
    %c0_116 = arith.constant 0 : index
    %c0_117 = arith.constant 0 : index
    %151 = vector.load %arg8[%c3_115, %c0_116, %c0_117] : memref<4x8x32xf32, #tpu.memory_space<vmem>>, vector<1x8x32xf32>
    %152 = vector.shape_cast %151 : vector<1x8x32xf32> to vector<8x32xf32>
    %cst_118 = arith.constant dense<0.000000e+00> : vector<8x32xf32>
    %153 = tpu.matmul %150, %152, %cst_118 {dimension_numbers = #tpu.dot_dimension_numbers<[1], [0], [0], [1], [0, 0, 1, 1], [], []>} : vector<8x8xf32>, vector<8x32xf32>, vector<8x32xf32> -> vector<8x32xf32>
    %154 = arith.addf %116, %153 : vector<8x32xf32>
    %c0_119 = arith.constant 0 : index
    %c0_120 = arith.constant 0 : index
    %155 = vector.load %arg9[%c0_119, %c0_120] : memref<1x32xf32, #tpu.memory_space<vmem>>, vector<1x32xf32>
    %156 = vector.broadcast %155 : vector<1x32xf32> to vector<8x32xf32>
    %157 = arith.addf %154, %156 : vector<8x32xf32>
    %c0_121 = arith.constant 0 : index
    %c0_122 = arith.constant 0 : index
    %c0_123 = arith.constant 0 : index
    %158 = vector.load %arg10[%c0_121, %c0_122, %c0_123] : memref<1x8x32xf32, #tpu.memory_space<vmem>>, vector<1x8x32xf32>
    %159 = vector.shape_cast %158 : vector<1x8x32xf32> to vector<8x32xf32>
    %160 = vector.shape_cast %157 : vector<8x32xf32> to vector<1x8x32xf32>
    tpu.vector_store %arg10[%c0_121, %c0_122, %c0_123], %160 {strides = array<i32>} : memref<1x8x32xf32, #tpu.memory_space<vmem>>, vector<1x8x32xf32>,
    return
  }
  func.func @transform_0(%arg0: i32) -> (i32, i32, i32) {
    %c0_i32 = arith.constant 0 : i32
    %c0_i32_0 = arith.constant 0 : i32
    %c0_i32_1 = arith.constant 0 : i32
    return %arg0, %c0_i32, %c0_i32_0 : i32, i32, i32
  }
  func.func @transform_1(%arg0: i32) -> (i32, i32, i32) {
    %c0_i32 = arith.constant 0 : i32
    %c0_i32_0 = arith.constant 0 : i32
    %c0_i32_1 = arith.constant 0 : i32
    %c0_i32_2 = arith.constant 0 : i32
    return %c0_i32, %c0_i32_0, %c0_i32_1 : i32, i32, i32
  }
  func.func @transform_2(%arg0: i32) -> (i32, i32, i32) {
    %c0_i32 = arith.constant 0 : i32
    %c0_i32_0 = arith.constant 0 : i32
    %c0_i32_1 = arith.constant 0 : i32
    %c0_i32_2 = arith.constant 0 : i32
    return %c0_i32, %c0_i32_0, %c0_i32_1 : i32, i32, i32
  }
  func.func @transform_3(%arg0: i32) -> (i32, i32, i32) {
    %c0_i32 = arith.constant 0 : i32
    %c0_i32_0 = arith.constant 0 : i32
    %c0_i32_1 = arith.constant 0 : i32
    %c0_i32_2 = arith.constant 0 : i32
    return %c0_i32, %c0_i32_0, %c0_i32_1 : i32, i32, i32
  }
  func.func @transform_4(%arg0: i32) -> (i32, i32, i32) {
    %c0_i32 = arith.constant 0 : i32
    %c0_i32_0 = arith.constant 0 : i32
    %c0_i32_1 = arith.constant 0 : i32
    %c0_i32_2 = arith.constant 0 : i32
    return %c0_i32, %c0_i32_0, %c0_i32_1 : i32, i32, i32
  }
  func.func @transform_5(%arg0: i32) -> (i32, i32, i32) {
    %c0_i32 = arith.constant 0 : i32
    %c0_i32_0 = arith.constant 0 : i32
    %c0_i32_1 = arith.constant 0 : i32
    %c0_i32_2 = arith.constant 0 : i32
    return %c0_i32, %c0_i32_0, %c0_i32_1 : i32, i32, i32
  }
  func.func @transform_6(%arg0: i32) -> (i32, i32, i32) {
    %c0_i32 = arith.constant 0 : i32
    %c0_i32_0 = arith.constant 0 : i32
    %c0_i32_1 = arith.constant 0 : i32
    %c0_i32_2 = arith.constant 0 : i32
    return %c0_i32, %c0_i32_0, %c0_i32_1 : i32, i32, i32
  }
  func.func @transform_7(%arg0: i32) -> (i32, i32, i32) {
    %c0_i32 = arith.constant 0 : i32
    %c0_i32_0 = arith.constant 0 : i32
    %c0_i32_1 = arith.constant 0 : i32
    %c0_i32_2 = arith.constant 0 : i32
    return %c0_i32, %c0_i32_0, %c0_i32_1 : i32, i32, i32
  }
  func.func @transform_8(%arg0: i32) -> (i32, i32) {
    %c0_i32 = arith.constant 0 : i32
    %c0_i32_0 = arith.constant 0 : i32
    %c0_i32_1 = arith.constant 0 : i32
    return %c0_i32, %c0_i32_0 : i32, i32
  }
  func.func @transform_9(%arg0: i32) -> (i32, i32, i32) {
    %c0_i32 = arith.constant 0 : i32
    %c0_i32_0 = arith.constant 0 : i32
    %c0_i32_1 = arith.constant 0 : i32
    return %arg0, %c0_i32, %c0_i32_0 : i32, i32, i32
  }
}

</mosaic_0001>

<llo_original>
// kernel: tpu_custom_call.1
$region0: #{tpu_custom_call.1}
  #allocation0 [shape = 'u32[]', space=smem, size = 0x4, offset = 0x4, fixed_abs, tag = 'smem constant byte address 0x4 - core index']
  #allocation1 [shape = 'u32[144,128]{1,0:T(1,128)}', space=vmem, size = 0x12000, scoped, tag = 'internal scratch']
  %s0 = inlined_call_operand.vmem [shape: f32[2,8,32], index: 0, kind: input, shape index: {}]
  %s1 = inlined_call_operand.vmem [shape: f32[4,32,8], index: 1, kind: input, shape index: {}]
  %s2 = inlined_call_operand.vmem [shape: f32[4,1,8], index: 2, kind: input, shape index: {}]
  %s3 = inlined_call_operand.vmem [shape: f32[4,32,8], index: 3, kind: input, shape index: {}]
  %s4 = inlined_call_operand.vmem [shape: f32[4,1,8], index: 4, kind: input, shape index: {}]
  %s5 = inlined_call_operand.vmem [shape: f32[4,32,8], index: 5, kind: input, shape index: {}]
  %s6 = inlined_call_operand.vmem [shape: f32[4,1,8], index: 6, kind: input, shape index: {}]
  %s7 = inlined_call_operand.vmem [shape: f32[4,8,32], index: 7, kind: input, shape index: {}]
  %s8 = inlined_call_operand.vmem [shape: f32[1,32], index: 8, kind: input, shape index: {}]
  %s9 = inlined_call_operand.hbm [shape: f32[2,8,32], index: 9, kind: output, shape index: {}]
  %s10 = sld [smem:[#allocation0]]
  $region69: #{tpu_custom_call.1} parent=0
    _
  %s12 = ssub.s32 1, %s10
  %s13 = scalar_select 0, %s12, %s10
  $region1: #{tpu_custom_call.1} parent=0
    #allocation2 [shape = 'u8[8192]{0}', space=vmem, size = 0x2000, scoped, tag = 'output window, operand 0']
    #allocation3 [shape = 's32[2]{0}', space=sflag, size = 0x8, scoped, tag = 'scoped memory for tpu_custom_call.1']
    %14 = vsyncpa [#allocation3], 0
    %s15 = scalar_lea.sflag [#allocation3], 1
    %16 = vsyncpa %s15, 0
    loop: start=0, step=1, limit=4
    $region2: #{tpu_custom_call.1} parent=1 // loop_pre_header
      _
    $region3: #{tpu_custom_call.1} parent=1 // loop_header
      %s18 = sphi 0, %s22
      %p19 = scmp.ge.s32.totalorder %s18, 4
      %s28 = sphi 0, %s30
      %s31 = sphi 0, %s28
      %s32 = sphi 0, %s31
      %s48 = sphi 0, %s32
      %s52 = sphi 0, %s52
      %s54 = sphi 0, %s52
      %s55 = sphi 0, %s54
      %s69 = sphi 0, %s55
      %s73 = sphi 0, %s73
      %s75 = sphi 0, %s73
      %s76 = sphi 0, %s75
      %s90 = sphi 0, %s76
      %s94 = sphi 0, %s94
      %s96 = sphi 0, %s94
      %s97 = sphi 0, %s96
      %s111 = sphi 0, %s97
      %s115 = sphi 0, %s115
      %s117 = sphi 0, %s115
      %s118 = sphi 0, %s117
      %s132 = sphi 0, %s118
      %s136 = sphi 0, %s136
      %s138 = sphi 0, %s136
      %s139 = sphi 0, %s138
      %s153 = sphi 0, %s139
      %s157 = sphi 0, %s157
      %s159 = sphi 0, %s157
      %s160 = sphi 0, %s159
      %s174 = sphi 0, %s160
      %s178 = sphi 0, %s178
      %s180 = sphi 0, %s178
      %s181 = sphi 0, %s180
      %s195 = sphi 0, %s181
      %s199 = sphi 0, %s199
      %s201 = sphi 0, %s199
      %s202 = sphi 0, %s201
      %s216 = sphi 0, %s202
      %s222 = sphi 0, %s224
      %s225 = sphi 0, %s222
      %s226 = sphi 0, %s225
      %s242 = sphi 0, %s226
    $region4: #{tpu_custom_call.1} parent=1 // loop_header_branch
      %21 = sbr.rel (%p19) target = $region8
    $region5: #{tpu_custom_call.1} parent=1 // loop_body
      %s23 = ssub.s32 %s18, 1
      %s24 = ssub.s32 %s18, 2
      %s25 = sadd.s32 %s18, 1
      %s26 = ssub.s32 %s18, %s25
      %p27 = scmp.eq.s32.totalorder %s26, 0
      %s29 = sadd.s32 %s28, 1
      %s30 = scalar_select %p27, %s28, %s29
      %p33 = pneg %p27
      %p34 = scmp.eq.s32.totalorder %s18, 1
      %p35 = por %p33, %p34
      %p36 = scmp.ne.s32.totalorder %s28, %s31
      %p37 = scmp.eq.s32.totalorder %s18, 0
      %p38 = por %p36, %p37
      %p39 = scmp.ne.s32.totalorder %s28, %s31
      %p40 = scmp.eq.s32.totalorder %s23, 1
      %p41 = por %p39, %p40
      %p42 = scmp.ne.s32.totalorder %s31, %s32
      %p43 = scmp.eq.s32.totalorder %s23, 0
      %p44 = por %p42, %p43
      %p45 = scmp.ne.s32.totalorder %s31, %s32
      %p46 = scmp.eq.s32.totalorder %s24, 1
      %p47 = por %p45, %p46
      %p49 = scmp.ne.s32.totalorder %s32, %s48
      %p50 = scmp.eq.s32.totalorder %s24, 0
      %p51 = por %p49, %p50
      %s53 = sadd.s32 %s52, 1
      %p56 = scmp.eq.s32.totalorder %s18, 1
      %p57 = scmp.ne.s32.totalorder %s52, %s54
      %p58 = scmp.eq.s32.totalorder %s18, 0
      %p59 = por %p57, %p58
      %p60 = scmp.ne.s32.totalorder %s52, %s54
      %p61 = scmp.eq.s32.totalorder %s23, 1
      %p62 = por %p60, %p61
      %p63 = scmp.ne.s32.totalorder %s54, %s55
      %p64 = scmp.eq.s32.totalorder %s23, 0
      %p65 = por %p63, %p64
      %p66 = scmp.ne.s32.totalorder %s54, %s55
      %p67 = scmp.eq.s32.totalorder %s24, 1
      %p68 = por %p66, %p67
      %p70 = scmp.ne.s32.totalorder %s55, %s69
      %p71 = scmp.eq.s32.totalorder %s24, 0
      %p72 = por %p70, %p71
      %s74 = sadd.s32 %s73, 1
      %p77 = scmp.eq.s32.totalorder %s18, 1
      %p78 = scmp.ne.s32.totalorder %s73, %s75
      %p79 = scmp.eq.s32.totalorder %s18, 0
      %p80 = por %p78, %p79
      %p81 = scmp.ne.s32.totalorder %s73, %s75
      %p82 = scmp.eq.s32.totalorder %s23, 1
      %p83 = por %p81, %p82
      %p84 = scmp.ne.s32.totalorder %s75, %s76
      %p85 = scmp.eq.s32.totalorder %s23, 0
      %p86 = por %p84, %p85
      %p87 = scmp.ne.s32.totalorder %s75, %s76
      %p88 = scmp.eq.s32.totalorder %s24, 1
      %p89 = por %p87, %p88
      %p91 = scmp.ne.s32.totalorder %s76, %s90
      %p92 = scmp.eq.s32.totalorder %s24, 0
      %p93 = por %p91, %p92
      %s95 = sadd.s32 %s94, 1
      %p98 = scmp.eq.s32.totalorder %s18, 1
      %p99 = scmp.ne.s32.totalorder %s94, %s96
      %p100 = scmp.eq.s32.totalorder %s18, 0
      %p101 = por %p99, %p100
      %p102 = scmp.ne.s32.totalorder %s94, %s96
      %p103 = scmp.eq.s32.totalorder %s23, 1
      %p104 = por %p102, %p103
      %p105 = scmp.ne.s32.totalorder %s96, %s97
      %p106 = scmp.eq.s32.totalorder %s23, 0
      %p107 = por %p105, %p106
      %p108 = scmp.ne.s32.totalorder %s96, %s97
      %p109 = scmp.eq.s32.totalorder %s24, 1
      %p110 = por %p108, %p109
      %p112 = scmp.ne.s32.totalorder %s97, %s111
      %p113 = scmp.eq.s32.totalorder %s24, 0
      %p114 = por %p112, %p113
      %s116 = sadd.s32 %s115, 1
      %p119 = scmp.eq.s32.totalorder %s18, 1
      %p120 = scmp.ne.s32.totalorder %s115, %s117
      %p121 = scmp.eq.s32.totalorder %s18, 0
      %p122 = por %p120, %p121
      %p123 = scmp.ne.s32.totalorder %s115, %s117
      %p124 = scmp.eq.s32.totalorder %s23, 1
      %p125 = por %p123, %p124
      %p126 = scmp.ne.s32.totalorder %s117, %s118
      %p127 = scmp.eq.s32.totalorder %s23, 0
      %p128 = por %p126, %p127
      %p129 = scmp.ne.s32.totalorder %s117, %s118
      %p130 = scmp.eq.s32.totalorder %s24, 1
      %p131 = por %p129, %p130
      %p133 = scmp.ne.s32.totalorder %s118, %s132
      %p134 = scmp.eq.s32.totalorder %s24, 0
      %p135 = por %p133, %p134
      %s137 = sadd.s32 %s136, 1
      %p140 = scmp.eq.s32.totalorder %s18, 1
      %p141 = scmp.ne.s32.totalorder %s136, %s138
      %p142 = scmp.eq.s32.totalorder %s18, 0
      %p143 = por %p141, %p142
      %p144 = scmp.ne.s32.totalorder %s136, %s138
      %p145 = scmp.eq.s32.totalorder %s23, 1
      %p146 = por %p144, %p145
      %p147 = scmp.ne.s32.totalorder %s138, %s139
      %p148 = scmp.eq.s32.totalorder %s23, 0
      %p149 = por %p147, %p148
      %p150 = scmp.ne.s32.totalorder %s138, %s139
      %p151 = scmp.eq.s32.totalorder %s24, 1
      %p152 = por %p150, %p151
      %p154 = scmp.ne.s32.totalorder %s139, %s153
      %p155 = scmp.eq.s32.totalorder %s24, 0
      %p156 = por %p154, %p155
      %s158 = sadd.s32 %s157, 1
      %p161 = scmp.eq.s32.totalorder %s18, 1
      %p162 = scmp.ne.s32.totalorder %s157, %s159
      %p163 = scmp.eq.s32.totalorder %s18, 0
      %p164 = por %p162, %p163
      %p165 = scmp.ne.s32.totalorder %s157, %s159
      %p166 = scmp.eq.s32.totalorder %s23, 1
      %p167 = por %p165, %p166
      %p168 = scmp.ne.s32.totalorder %s159, %s160
      %p169 = scmp.eq.s32.totalorder %s23, 0
      %p170 = por %p168, %p169
      %p171 = scmp.ne.s32.totalorder %s159, %s160
      %p172 = scmp.eq.s32.totalorder %s24, 1
      %p173 = por %p171, %p172
      %p175 = scmp.ne.s32.totalorder %s160, %s174
      %p176 = scmp.eq.s32.totalorder %s24, 0
      %p177 = por %p175, %p176
      %s179 = sadd.s32 %s178, 1
      %p182 = scmp.eq.s32.totalorder %s18, 1
      %p183 = scmp.ne.s32.totalorder %s178, %s180
      %p184 = scmp.eq.s32.totalorder %s18, 0
      %p185 = por %p183, %p184
      %p186 = scmp.ne.s32.totalorder %s178, %s180
      %p187 = scmp.eq.s32.totalorder %s23, 1
      %p188 = por %p186, %p187
      %p189 = scmp.ne.s32.totalorder %s180, %s181
      %p190 = scmp.eq.s32.totalorder %s23, 0
      %p191 = por %p189, %p190
      %p192 = scmp.ne.s32.totalorder %s180, %s181
      %p193 = scmp.eq.s32.totalorder %s24, 1
      %p194 = por %p192, %p193
      %p196 = scmp.ne.s32.totalorder %s181, %s195
      %p197 = scmp.eq.s32.totalorder %s24, 0
      %p198 = por %p196, %p197
      %s200 = sadd.s32 %s199, 1
      %p203 = scmp.eq.s32.totalorder %s18, 1
      %p204 = scmp.ne.s32.totalorder %s199, %s201
      %p205 = scmp.eq.s32.totalorder %s18, 0
      %p206 = por %p204, %p205
      %p207 = scmp.ne.s32.totalorder %s199, %s201
      %p208 = scmp.eq.s32.totalorder %s23, 1
      %p209 = por %p207, %p208
      %p210 = scmp.ne.s32.totalorder %s201, %s202
      %p211 = scmp.eq.s32.totalorder %s23, 0
      %p212 = por %p210, %p211
      %p213 = scmp.ne.s32.totalorder %s201, %s202
      %p214 = scmp.eq.s32.totalorder %s24, 1
      %p215 = por %p213, %p214
      %p217 = scmp.ne.s32.totalorder %s202, %s216
      %p218 = scmp.eq.s32.totalorder %s24, 0
      %p219 = por %p217, %p218
      %s220 = ssub.s32 %s18, %s25
      %p221 = scmp.eq.s32.totalorder %s220, 0
      %s223 = sadd.s32 %s222, 1
      %s224 = scalar_select %p221, %s222, %s223
      %p227 = pneg %p221
      %p228 = scmp.eq.s32.totalorder %s18, 1
      %p229 = por %p227, %p228
      %p230 = scmp.ne.s32.totalorder %s222, %s225
      %p231 = scmp.eq.s32.totalorder %s18, 0
      %p232 = por %p230, %p231
      %p233 = scmp.ne.s32.totalorder %s222, %s225
      %p234 = scmp.eq.s32.totalorder %s23, 1
      %p235 = por %p233, %p234
      %p236 = scmp.ne.s32.totalorder %s225, %s226
      %p237 = scmp.eq.s32.totalorder %s23, 0
      %p238 = por %p236, %p237
      %p239 = scmp.ne.s32.totalorder %s225, %s226
      %p240 = scmp.eq.s32.totalorder %s24, 1
      %p241 = por %p239, %p240
      %p243 = scmp.ne.s32.totalorder %s226, %s242
      %p244 = scmp.eq.s32.totalorder %s24, 0
      %p245 = por %p243, %p244
      %p246 = scmp.le.s32.totalorder 1, %s18
      %p247 = scmp.lt.s32.totalorder %s18, 3
      %p248 = pnand %p246, %p247
      %p249 = pneg %p248
      // Predicated region
      $region9: #{tpu_custom_call.1} parent=5 // pred_check
        _
      $region10: #{tpu_custom_call.1} parent=5 // pred_check_branch
        %251 = sbr.rel (%p248) target = $region12
      $region11: #{tpu_custom_call.1} parent=5 // pred_region
        %s252 = ssub.s32 %s18, 1
        // Predicated region
        $region13: #{tpu_custom_call.1} parent=11 // pred_check
          %p253 = pneg %p65
        $region14: #{tpu_custom_call.1} parent=11 // pred_check_branch
          %255 = sbr.rel (%p253) target = $region16
        $region15: #{tpu_custom_call.1} parent=11 // pred_region
          _
        $region16: #{tpu_custom_call.1} parent=11 // pred_fallthru
          _
        // Predicated region
        $region17: #{tpu_custom_call.1} parent=11 // pred_check
          %p256 = pneg %p86
        $region18: #{tpu_custom_call.1} parent=11 // pred_check_branch
          %258 = sbr.rel (%p256) target = $region20
        $region19: #{tpu_custom_call.1} parent=11 // pred_region
          _
        $region20: #{tpu_custom_call.1} parent=11 // pred_fallthru
          _
        // Predicated region
        $region21: #{tpu_custom_call.1} parent=11 // pred_check
          %p259 = pneg %p107
        $region22: #{tpu_custom_call.1} parent=11 // pred_check_branch
          %261 = sbr.rel (%p259) target = $region24
        $region23: #{tpu_custom_call.1} parent=11 // pred_region
          _
        $region24: #{tpu_custom_call.1} parent=11 // pred_fallthru
          _
        // Predicated region
        $region25: #{tpu_custom_call.1} parent=11 // pred_check
          %p262 = pneg %p128
        $region26: #{tpu_custom_call.1} parent=11 // pred_check_branch
          %264 = sbr.rel (%p262) target = $region28
        $region27: #{tpu_custom_call.1} parent=11 // pred_region
          _
        $region28: #{tpu_custom_call.1} parent=11 // pred_fallthru
          _
        // Predicated region
        $region29: #{tpu_custom_call.1} parent=11 // pred_check
          %p265 = pneg %p149
        $region30: #{tpu_custom_call.1} parent=11 // pred_check_branch
          %267 = sbr.rel (%p265) target = $region32
        $region31: #{tpu_custom_call.1} parent=11 // pred_region
          _
        $region32: #{tpu_custom_call.1} parent=11 // pred_fallthru
          _
        // Predicated region
        $region33: #{tpu_custom_call.1} parent=11 // pred_check
          %p268 = pneg %p170
        $region34: #{tpu_custom_call.1} parent=11 // pred_check_branch
          %270 = sbr.rel (%p268) target = $region36
        $region35: #{tpu_custom_call.1} parent=11 // pred_region
          _
        $region36: #{tpu_custom_call.1} parent=11 // pred_fallthru
          _
        // Predicated region
        $region37: #{tpu_custom_call.1} parent=11 // pred_check
          %p271 = pneg %p191
        $region38: #{tpu_custom_call.1} parent=11 // pred_check_branch
          %273 = sbr.rel (%p271) target = $region40
        $region39: #{tpu_custom_call.1} parent=11 // pred_region
          _
        $region40: #{tpu_custom_call.1} parent=11 // pred_fallthru
          _
        // Predicated region
        $region41: #{tpu_custom_call.1} parent=11 // pred_check
          %p274 = pneg %p212
        $region42: #{tpu_custom_call.1} parent=11 // pred_check_branch
          %276 = sbr.rel (%p274) target = $region44
        $region43: #{tpu_custom_call.1} parent=11 // pred_region
          _
        $region44: #{tpu_custom_call.1} parent=11 // pred_fallthru
          _
      $region12: #{tpu_custom_call.1} parent=5 // pred_fallthru
        _
      %p277 = scmp.lt.s32.totalorder %s18, 2
      // Predicated region
      $region45: #{tpu_custom_call.1} parent=5 // pred_check
        %p278 = pneg %p277
      $region46: #{tpu_custom_call.1} parent=5 // pred_check_branch
        %280 = sbr.rel (%p278) target = $region48
      $region47: #{tpu_custom_call.1} parent=5 // pred_region
        // Predicated region
        $region49: #{tpu_custom_call.1} parent=47 // pred_check
          %p281 = pneg %p38
        $region50: #{tpu_custom_call.1} parent=47 // pred_check_branch
          %283 = sbr.rel (%p281) target = $region52
        $region51: #{tpu_custom_call.1} parent=47 // pred_region
          %p284 = scmp.lt.s32.totalorder %s18, 1
          %s285 = scalar_select %p284, %s18, 1
          %s286 = smul.addr %s285, 8
          %s287 = scalar_lea.vmem %s0, %s286
        $region52: #{tpu_custom_call.1} parent=47 // pred_fallthru
          _
      $region48: #{tpu_custom_call.1} parent=5 // pred_fallthru
        _
      %p288 = scmp.le.s32.totalorder 1, %s18
      %p289 = scmp.lt.s32.totalorder %s18, 3
      %p290 = pnand %p288, %p289
      %p291 = pneg %p290
      // Predicated region
      $region53: #{tpu_custom_call.1} parent=5 // pred_check
        _
      $region54: #{tpu_custom_call.1} parent=5 // pred_check_branch
        %293 = sbr.rel (%p290) target = $region56
      $region55: #{tpu_custom_call.1} parent=5 // pred_region
        %s294 = ssub.s32 %s18, 1
        %p295 = scmp.lt.s32.totalorder %s23, 1
        %s296 = scalar_select %p295, %s23, 1
        %s297 = smul.addr %s296, 8
        %s298 = scalar_lea.vmem %s0, %s297
        %p299 = pneg %p44
        %p300 = pneg %p41
        %p301 = pneg %p65
        %p302 = pneg %p62
        %p303 = pneg %p86
        %p304 = pneg %p83
        %p305 = pneg %p107
        %p306 = pneg %p104
        %p307 = pneg %p128
        %p308 = pneg %p125
        %p309 = pneg %p149
        %p310 = pneg %p146
        %p311 = pneg %p170
        %p312 = pneg %p167
        %p313 = pneg %p191
        %p314 = pneg %p188
        %p315 = pneg %p212
        %p316 = pneg %p209
        %p317 = pneg %p238
        %p318 = pneg %p235
        %s319 = sand.u32 %s225, 1
        %s320 = scalar_lea.sflag [#allocation3], %s319
        %s321 = sand.u32 %s225, 1
        %s322 = smul.addr %s321, 8
        %s323 = scalar_lea.vmem [#allocation2], %s322
        %p324 = scmp.lt.s32.totalorder %s23, 1
        %s325 = scalar_select %p324, %s23, 1
        %s326 = smul.addr %s325, 8
        %s327 = scalar_lea.vmem %s0, %s326
        %v328 = vld [vmem:[%s327] sm:$0xff]
        %v329 = vld [vmem:[%s1] sm:$0xff]
        %v330 = vld [vmem:[%s1 + $0x8] sm:$0xff]
        %v331 = vld [vmem:[%s1 + $0x10] sm:$0xff]
        %v332 = vld [vmem:[%s1 + $0x18] sm:$0xff]
        %v333 = vld [vmem:[%s2] sm:$0x1]
        %v335 = vlaneseq
        %v336 = vshrl.u32 %v335, 7
        %v337 = vsub.s32 0, %v336
        %v338 = vrot.slane %v333, %v337
        %vm340 = vcmask 261120
        %v342 = vsel %vm340, %v328, 0
        %344 = vmatprep.subr.mxu0 0.0
        %345 = vmatpush1.msra.mxu0 %v329
        %346 = vmatprep.subr.mxu0 0.0
        %347 = vmatpush1.msra.mxu0 %v330
        %348 = vmatprep.subr.mxu0 0.0
        %349 = vmatpush1.msra.mxu0 %v331
        %350 = vmatprep.subr.mxu0 0.0
        %351 = vmatpush1.msra.mxu0 %v332
        %352 = vmatprep.subr.mxu0 0.0
        %353 = vmatpush1.msra.mxu0 0.0
        %354 = vmatprep.subr.mxu0 0.0
        %355 = vmatpush1.msra.mxu0 0.0
        %356 = vmatprep.subr.mxu0 0.0
        %357 = vmatpush1.msra.mxu0 0.0
        %358 = vmatprep.subr.mxu0 0.0
        %359 = vmatpush1.msra.mxu0 0.0
        %360 = vmatprep.subr.mxu0 0.0
        %361 = vmatpush1.msra.mxu0 0.0
        %362 = vmatprep.subr.mxu0 0.0
        %363 = vmatpush1.msra.mxu0 0.0
        %364 = vmatprep.subr.mxu0 0.0
        %365 = vmatpush1.msra.mxu0 0.0
        %366 = vmatprep.subr.mxu0 0.0
        %367 = vmatpush1.msra.mxu0 0.0
        %368 = vmatprep.subr.mxu0 0.0
        %369 = vmatpush1.msra.mxu0 0.0
        %370 = vmatprep.subr.mxu0 0.0
        %371 = vmatpush1.msra.mxu0 0.0
        %372 = vmatprep.subr.mxu0 0.0
        %373 = vmatpush1.msra.mxu0 0.0
        %374 = vmatprep.subr.mxu0 0.0
        %375 = vmatpush1.msra.mxu0 0.0
        %376 = vmatprep.subr.mxu0 0.0
        %377 = vmatpush1.msra.mxu0 0.0
        %378 = vmatprep.subr.mxu0 0.0
        %379 = vmatpush1.msra.mxu0 0.0
        %380 = vmatprep.subr.mxu0 0.0
        %381 = vmatpush1.msra.mxu0 0.0
        %382 = vmatprep.subr.mxu0 0.0
        %383 = vmatpush1.msra.mxu0 0.0
        %384 = vmatprep.subr.mxu0 0.0
        %385 = vmatpush1.msra.mxu0 0.0
        %386 = vmatprep.subr.mxu0 0.0
        %387 = vmatpush1.msra.mxu0 0.0
        %388 = vmatprep.subr.mxu0 0.0
        %389 = vmatpush1.msra.mxu0 0.0
        %390 = vmatprep.subr.mxu0 0.0
        %391 = vmatpush1.msra.mxu0 0.0
        %392 = vmatprep.subr.mxu0 0.0
        %393 = vmatpush1.msra.mxu0 0.0
        %394 = vmatprep.subr.mxu0 0.0
        %395 = vmatpush1.msra.mxu0 0.0
        %396 = vmatprep.subr.mxu0 0.0
        %397 = vmatpush1.msra.mxu0 0.0
        %398 = vmatprep.subr.mxu0 0.0
        %399 = vmatpush1.msra.mxu0 0.0
        %400 = vmatprep.subr.mxu0 0.0
        %401 = vmatpush1.msra.mxu0 0.0
        %402 = vmatprep.subr.mxu0 0.0
        %403 = vmatpush1.msra.mxu0 0.0
        %404 = vmatprep.subr.mxu0 0.0
        %405 = vmatpush1.msra.mxu0 0.0
        %406 = vmatprep.subr.mxu0 0.0
        %407 = vmatpush1.msra.mxu0 0.0
        %408 = vmatprep.mubr.f32.mxu0 0.0
        %409 = vmatmul.mubr.f32.gmra.mrb[0].mxu0 %v342
        %v410 = vpop.f32.mrb[0].mxu0
        %v411 = vadd.f32 %v338, %v410
        %v412 = vpop.f32.mrb[0].mxu0
        %413 = vdwg.mxu0
        %v414 = vld [vmem:[%s3] sm:$0xff]
        %v415 = vld [vmem:[%s3 + $0x8] sm:$0xff]
        %v416 = vld [vmem:[%s3 + $0x10] sm:$0xff]
        %v417 = vld [vmem:[%s3 + $0x18] sm:$0xff]
        %v418 = vld [vmem:[%s4] sm:$0x1]
        %v420 = vlaneseq
        %v421 = vshrl.u32 %v420, 7
        %v422 = vsub.s32 0, %v421
        %v423 = vrot.slane %v418, %v422
        %425 = vmatprep.subr.mxu0 0.0
        %426 = vmatpush1.msra.mxu0 %v414
        %427 = vmatprep.subr.mxu0 0.0
        %428 = vmatpush1.msra.mxu0 %v415
        %429 = vmatprep.subr.mxu0 0.0
        %430 = vmatpush1.msra.mxu0 %v416
        %431 = vmatprep.subr.mxu0 0.0
        %432 = vmatpush1.msra.mxu0 %v417
        %433 = vmatprep.subr.mxu0 0.0
        %434 = vmatpush1.msra.mxu0 0.0
        %435 = vmatprep.subr.mxu0 0.0
        %436 = vmatpush1.msra.mxu0 0.0
        %437 = vmatprep.subr.mxu0 0.0
        %438 = vmatpush1.msra.mxu0 0.0
        %439 = vmatprep.subr.mxu0 0.0
        %440 = vmatpush1.msra.mxu0 0.0
        %441 = vmatprep.subr.mxu0 0.0
        %442 = vmatpush1.msra.mxu0 0.0
        %443 = vmatprep.subr.mxu0 0.0
        %444 = vmatpush1.msra.mxu0 0.0
        %445 = vmatprep.subr.mxu0 0.0
        %446 = vmatpush1.msra.mxu0 0.0
        %447 = vmatprep.subr.mxu0 0.0
        %448 = vmatpush1.msra.mxu0 0.0
        %449 = vmatprep.subr.mxu0 0.0
        %450 = vmatpush1.msra.mxu0 0.0
        %451 = vmatprep.subr.mxu0 0.0
        %452 = vmatpush1.msra.mxu0 0.0
        %453 = vmatprep.subr.mxu0 0.0
        %454 = vmatpush1.msra.mxu0 0.0
        %455 = vmatprep.subr.mxu0 0.0
        %456 = vmatpush1.msra.mxu0 0.0
        %457 = vmatprep.subr.mxu0 0.0
        %458 = vmatpush1.msra.mxu0 0.0
        %459 = vmatprep.subr.mxu0 0.0
        %460 = vmatpush1.msra.mxu0 0.0
        %461 = vmatprep.subr.mxu0 0.0
        %462 = vmatpush1.msra.mxu0 0.0
        %463 = vmatprep.subr.mxu0 0.0
        %464 = vmatpush1.msra.mxu0 0.0
        %465 = vmatprep.subr.mxu0 0.0
        %466 = vmatpush1.msra.mxu0 0.0
        %467 = vmatprep.subr.mxu0 0.0
        %468 = vmatpush1.msra.mxu0 0.0
        %469 = vmatprep.subr.mxu0 0.0
        %470 = vmatpush1.msra.mxu0 0.0
        %471 = vmatprep.subr.mxu0 0.0
        %472 = vmatpush1.msra.mxu0 0.0
        %473 = vmatprep.subr.mxu0 0.0
        %474 = vmatpush1.msra.mxu0 0.0
        %475 = vmatprep.subr.mxu0 0.0
        %476 = vmatpush1.msra.mxu0 0.0
        %477 = vmatprep.subr.mxu0 0.0
        %478 = vmatpush1.msra.mxu0 0.0
        %479 = vmatprep.subr.mxu0 0.0
        %480 = vmatpush1.msra.mxu0 0.0
        %481 = vmatprep.subr.mxu0 0.0
        %482 = vmatpush1.msra.mxu0 0.0
        %483 = vmatprep.subr.mxu0 0.0
        %484 = vmatpush1.msra.mxu0 0.0
        %485 = vmatprep.subr.mxu0 0.0
        %486 = vmatpush1.msra.mxu0 0.0
        %487 = vmatprep.subr.mxu0 0.0
        %488 = vmatpush1.msra.mxu0 0.0
        %489 = vmatprep.mubr.f32.mxu0 0.0
        %490 = vmatmul.mubr.f32.gmra.mrb[0].mxu0 %v342
        %v491 = vpop.f32.mrb[0].mxu0
        %v492 = vadd.f32 %v423, %v491
        %v493 = vpop.f32.mrb[0].mxu0
        %494 = vdwg.mxu0
        %v495 = vld [vmem:[%s5] sm:$0xff]
        %v496 = vld [vmem:[%s5 + $0x8] sm:$0xff]
        %v497 = vld [vmem:[%s5 + $0x10] sm:$0xff]
        %v498 = vld [vmem:[%s5 + $0x18] sm:$0xff]
        %v499 = vld [vmem:[%s6] sm:$0x1]
        %v501 = vlaneseq
        %v502 = vshrl.u32 %v501, 7
        %v503 = vsub.s32 0, %v502
        %v504 = vrot.slane %v499, %v503
        %506 = vmatprep.subr.mxu0 0.0
        %507 = vmatpush1.msra.mxu0 %v495
        %508 = vmatprep.subr.mxu0 0.0
        %509 = vmatpush1.msra.mxu0 %v496
        %510 = vmatprep.subr.mxu0 0.0
        %511 = vmatpush1.msra.mxu0 %v497
        %512 = vmatprep.subr.mxu0 0.0
        %513 = vmatpush1.msra.mxu0 %v498
        %514 = vmatprep.subr.mxu0 0.0
        %515 = vmatpush1.msra.mxu0 0.0
        %516 = vmatprep.subr.mxu0 0.0
        %517 = vmatpush1.msra.mxu0 0.0
        %518 = vmatprep.subr.mxu0 0.0
        %519 = vmatpush1.msra.mxu0 0.0
        %520 = vmatprep.subr.mxu0 0.0
        %521 = vmatpush1.msra.mxu0 0.0
        %522 = vmatprep.subr.mxu0 0.0
        %523 = vmatpush1.msra.mxu0 0.0
        %524 = vmatprep.subr.mxu0 0.0
        %525 = vmatpush1.msra.mxu0 0.0
        %526 = vmatprep.subr.mxu0 0.0
        %527 = vmatpush1.msra.mxu0 0.0
        %528 = vmatprep.subr.mxu0 0.0
        %529 = vmatpush1.msra.mxu0 0.0
        %530 = vmatprep.subr.mxu0 0.0
        %531 = vmatpush1.msra.mxu0 0.0
        %532 = vmatprep.subr.mxu0 0.0
        %533 = vmatpush1.msra.mxu0 0.0
        %534 = vmatprep.subr.mxu0 0.0
        %535 = vmatpush1.msra.mxu0 0.0
        %536 = vmatprep.subr.mxu0 0.0
        %537 = vmatpush1.msra.mxu0 0.0
        %538 = vmatprep.subr.mxu0 0.0
        %539 = vmatpush1.msra.mxu0 0.0
        %540 = vmatprep.subr.mxu0 0.0
        %541 = vmatpush1.msra.mxu0 0.0
        %542 = vmatprep.subr.mxu0 0.0
        %543 = vmatpush1.msra.mxu0 0.0
        %544 = vmatprep.subr.mxu0 0.0
        %545 = vmatpush1.msra.mxu0 0.0
        %546 = vmatprep.subr.mxu0 0.0
        %547 = vmatpush1.msra.mxu0 0.0
        %548 = vmatprep.subr.mxu0 0.0
        %549 = vmatpush1.msra.mxu0 0.0
        %550 = vmatprep.subr.mxu0 0.0
        %551 = vmatpush1.msra.mxu0 0.0
        %552 = vmatprep.subr.mxu0 0.0
        %553 = vmatpush1.msra.mxu0 0.0
        %554 = vmatprep.subr.mxu0 0.0
        %555 = vmatpush1.msra.mxu0 0.0
        %556 = vmatprep.subr.mxu0 0.0
        %557 = vmatpush1.msra.mxu0 0.0
        %558 = vmatprep.subr.mxu0 0.0
        %559 = vmatpush1.msra.mxu0 0.0
        %560 = vmatprep.subr.mxu0 0.0
        %561 = vmatpush1.msra.mxu0 0.0
        %562 = vmatprep.subr.mxu0 0.0
        %563 = vmatpush1.msra.mxu0 0.0
        %564 = vmatprep.subr.mxu0 0.0
        %565 = vmatpush1.msra.mxu0 0.0
        %566 = vmatprep.subr.mxu0 0.0
        %567 = vmatpush1.msra.mxu0 0.0
        %568 = vmatprep.subr.mxu0 0.0
        %569 = vmatpush1.msra.mxu0 0.0
        %570 = vmatprep.mubr.f32.mxu0 0.0
        %571 = vmatmul.mubr.f32.gmra.mrb[0].mxu0 %v342
        %v572 = vpop.f32.mrb[0].mxu0
        %v573 = vadd.f32 %v504, %v572
        %v574 = vpop.f32.mrb[0].mxu0
        %575 = vdwg.mxu0
        %vm576 = vcmask 64512
        %v578 = vsel %vm576, %v411, 0
        %v581 = vsel %vm576, %v492, 0
        %583 = vmatprep.subr.mxu0 0.0
        %584 = vmatpush1.xpose.msra.mxu0 %v581
        %585 = vmatprep.subr.mxu0 0.0
        %586 = vmatpush1.xpose.msra.mxu0 0.0
        %587 = vmatprep.subr.mxu0 0.0
        %588 = vmatpush1.xpose.msra.mxu0 0.0
        %589 = vmatprep.subr.mxu0 0.0
        %590 = vmatpush1.xpose.msra.mxu0 0.0
        %591 = vmatprep.subr.mxu0 0.0
        %592 = vmatpush1.xpose.msra.mxu0 0.0
        %593 = vmatprep.subr.mxu0 0.0
        %594 = vmatpush1.xpose.msra.mxu0 0.0
        %595 = vmatprep.subr.mxu0 0.0
        %596 = vmatpush1.xpose.msra.mxu0 0.0
        %597 = vmatprep.subr.mxu0 0.0
        %598 = vmatpush1.xpose.msra.mxu0 0.0
        %599 = vmatprep.subr.mxu0 0.0
        %600 = vmatpush1.xpose.msra.mxu0 0.0
        %601 = vmatprep.subr.mxu0 0.0
        %602 = vmatpush1.xpose.msra.mxu0 0.0
        %603 = vmatprep.subr.mxu0 0.0
        %604 = vmatpush1.xpose.msra.mxu0 0.0
        %605 = vmatprep.subr.mxu0 0.0
        %606 = vmatpush1.xpose.msra.mxu0 0.0
        %607 = vmatprep.subr.mxu0 0.0
        %608 = vmatpush1.xpose.msra.mxu0 0.0
        %609 = vmatprep.subr.mxu0 0.0
        %610 = vmatpush1.xpose.msra.mxu0 0.0
        %611 = vmatprep.subr.mxu0 0.0
        %612 = vmatpush1.xpose.msra.mxu0 0.0
        %613 = vmatprep.subr.mxu0 0.0
        %614 = vmatpush1.xpose.msra.mxu0 0.0
        %615 = vmatprep.subr.mxu0 0.0
        %616 = vmatpush1.xpose.msra.mxu0 0.0
        %617 = vmatprep.subr.mxu0 0.0
        %618 = vmatpush1.xpose.msra.mxu0 0.0
        %619 = vmatprep.subr.mxu0 0.0
        %620 = vmatpush1.xpose.msra.mxu0 0.0
        %621 = vmatprep.subr.mxu0 0.0
        %622 = vmatpush1.xpose.msra.mxu0 0.0
        %623 = vmatprep.subr.mxu0 0.0
        %624 = vmatpush1.xpose.msra.mxu0 0.0
        %625 = vmatprep.subr.mxu0 0.0
        %626 = vmatpush1.xpose.msra.mxu0 0.0
        %627 = vmatprep.subr.mxu0 0.0
        %628 = vmatpush1.xpose.msra.mxu0 0.0
        %629 = vmatprep.subr.mxu0 0.0
        %630 = vmatpush1.xpose.msra.mxu0 0.0
        %631 = vmatprep.subr.mxu0 0.0
        %632 = vmatpush1.xpose.msra.mxu0 0.0
        %633 = vmatprep.subr.mxu0 0.0
        %634 = vmatpush1.xpose.msra.mxu0 0.0
        %635 = vmatprep.subr.mxu0 0.0
        %636 = vmatpush1.xpose.msra.mxu0 0.0
        %637 = vmatprep.subr.mxu0 0.0
        %638 = vmatpush1.xpose.msra.mxu0 0.0
        %639 = vmatprep.subr.mxu0 0.0
        %640 = vmatpush1.xpose.msra.mxu0 0.0
        %641 = vmatprep.subr.mxu0 0.0
        %642 = vmatpush1.xpose.msra.mxu0 0.0
        %643 = vmatprep.subr.mxu0 0.0
        %644 = vmatpush1.xpose.msra.mxu0 0.0
        %645 = vmatprep.subr.mxu0 0.0
        %646 = vmatpush1.xpose.msra.mxu0 0.0
        %647 = vmatprep.mubr.f32.mxu0 0.0
        %648 = vmatmul.mubr.f32.gmra.mrb[0].mxu0 %v578
        %v649 = vpop.f32.mrb[0].mxu0
        %v650 = vadd.f32 0.0, %v649
        %v651 = vpop.f32.mrb[0].mxu0
        %652 = vdwg.mxu0
        %v653 = vmul.f32 %v650, 0.35355338
        %v654 = vsel %vm576, %v653, -inf
        %655 = vmax.xlane.f32.xlu0 %v654
        %v656 = vpop.xlane.xlu0 %655
        %v657 = vsub.f32 %v653, %v656
        %v658 = vmul.f32 %v657, 1.442695
        %v659 = vpow.pop %v658
        %v660 = vsel %vm576, %v659, 0.0
        %661 = vadd.xlane.f32.xlu0 %v660
        %v662 = vpop.xlane.xlu0 %661
        %v663 = vrcp.pop %v662
        %v664 = vmul.f32 %v659, %v663
        %v666 = vsel %vm576, %v664, 0
        %668 = vmatprep.subr.mxu0 0.0
        %669 = vmatpush1.msra.mxu0 %v573
        %670 = vmatprep.subr.mxu0 0.0
        %671 = vmatpush1.msra.mxu0 0.0
        %672 = vmatprep.subr.mxu0 0.0
        %673 = vmatpush1.msra.mxu0 0.0
        %674 = vmatprep.subr.mxu0 0.0
        %675 = vmatpush1.msra.mxu0 0.0
        %676 = vmatprep.subr.mxu0 0.0
        %677 = vmatpush1.msra.mxu0 0.0
        %678 = vmatprep.subr.mxu0 0.0
        %679 = vmatpush1.msra.mxu0 0.0
        %680 = vmatprep.subr.mxu0 0.0
        %681 = vmatpush1.msra.mxu0 0.0
        %682 = vmatprep.subr.mxu0 0.0
        %683 = vmatpush1.msra.mxu0 0.0
        %684 = vmatprep.subr.mxu0 0.0
        %685 = vmatpush1.msra.mxu0 0.0
        %686 = vmatprep.subr.mxu0 0.0
        %687 = vmatpush1.msra.mxu0 0.0
        %688 = vmatprep.subr.mxu0 0.0
        %689 = vmatpush1.msra.mxu0 0.0
        %690 = vmatprep.subr.mxu0 0.0
        %691 = vmatpush1.msra.mxu0 0.0
        %692 = vmatprep.subr.mxu0 0.0
        %693 = vmatpush1.msra.mxu0 0.0
        %694 = vmatprep.subr.mxu0 0.0
        %695 = vmatpush1.msra.mxu0 0.0
        %696 = vmatprep.subr.mxu0 0.0
        %697 = vmatpush1.msra.mxu0 0.0
        %698 = vmatprep.subr.mxu0 0.0
        %699 = vmatpush1.msra.mxu0 0.0
        %700 = vmatprep.subr.mxu0 0.0
        %701 = vmatpush1.msra.mxu0 0.0
        %702 = vmatprep.subr.mxu0 0.0
        %703 = vmatpush1.msra.mxu0 0.0
        %704 = vmatprep.subr.mxu0 0.0
        %705 = vmatpush1.msra.mxu0 0.0
        %706 = vmatprep.subr.mxu0 0.0
        %707 = vmatpush1.msra.mxu0 0.0
        %708 = vmatprep.subr.mxu0 0.0
        %709 = vmatpush1.msra.mxu0 0.0
        %710 = vmatprep.subr.mxu0 0.0
        %711 = vmatpush1.msra.mxu0 0.0
        %712 = vmatprep.subr.mxu0 0.0
        %713 = vmatpush1.msra.mxu0 0.0
        %714 = vmatprep.subr.mxu0 0.0
        %715 = vmatpush1.msra.mxu0 0.0
        %716 = vmatprep.subr.mxu0 0.0
        %717 = vmatpush1.msra.mxu0 0.0
        %718 = vmatprep.subr.mxu0 0.0
        %719 = vmatpush1.msra.mxu0 0.0
        %720 = vmatprep.subr.mxu0 0.0
        %721 = vmatpush1.msra.mxu0 0.0
        %722 = vmatprep.subr.mxu0 0.0
        %723 = vmatpush1.msra.mxu0 0.0
        %724 = vmatprep.subr.mxu0 0.0
        %725 = vmatpush1.msra.mxu0 0.0
        %726 = vmatprep.subr.mxu0 0.0
        %727 = vmatpush1.msra.mxu0 0.0
        %728 = vmatprep.subr.mxu0 0.0
        %729 = vmatpush1.msra.mxu0 0.0
        %730 = vmatprep.subr.mxu0 0.0
        %731 = vmatpush1.msra.mxu0 0.0
        %732 = vmatprep.mubr.f32.mxu0 0.0
        %733 = vmatmul.mubr.f32.gmra.mrb[0].mxu0 %v666
        %v734 = vpop.f32.mrb[0].mxu0
        %v735 = vadd.f32 0.0, %v734
        %v736 = vpop.f32.mrb[0].mxu0
        %737 = vdwg.mxu0
        %v738 = vld [vmem:[%s7] sm:$0xff]
        %s739 = scalar_lea.vmem %s1, 32
        %v740 = vld [vmem:[%s739] sm:$0xff]
        %v741 = vld [vmem:[%s739 + $0x8] sm:$0xff]
        %v742 = vld [vmem:[%s739 + $0x10] sm:$0xff]
        %v743 = vld [vmem:[%s739 + $0x18] sm:$0xff]
        %s744 = scalar_lea.vmem %s2, 1
        %v745 = vld [vmem:[%s744] sm:$0x1]
        %v747 = vlaneseq
        %v748 = vshrl.u32 %v747, 7
        %v749 = vsub.s32 0, %v748
        %v750 = vrot.slane %v745, %v749
        %752 = vmatprep.subr.mxu0 0.0
        %753 = vmatpush1.msra.mxu0 %v740
        %754 = vmatprep.subr.mxu0 0.0
        %755 = vmatpush1.msra.mxu0 %v741
        %756 = vmatprep.subr.mxu0 0.0
        %757 = vmatpush1.msra.mxu0 %v742
        %758 = vmatprep.subr.mxu0 0.0
        %759 = vmatpush1.msra.mxu0 %v743
        %760 = vmatprep.subr.mxu0 0.0
        %761 = vmatpush1.msra.mxu0 0.0
        %762 = vmatprep.subr.mxu0 0.0
        %763 = vmatpush1.msra.mxu0 0.0
        %764 = vmatprep.subr.mxu0 0.0
        %765 = vmatpush1.msra.mxu0 0.0
        %766 = vmatprep.subr.mxu0 0.0
        %767 = vmatpush1.msra.mxu0 0.0
        %768 = vmatprep.subr.mxu0 0.0
        %769 = vmatpush1.msra.mxu0 0.0
        %770 = vmatprep.subr.mxu0 0.0
        %771 = vmatpush1.msra.mxu0 0.0
        %772 = vmatprep.subr.mxu0 0.0
        %773 = vmatpush1.msra.mxu0 0.0
        %774 = vmatprep.subr.mxu0 0.0
        %775 = vmatpush1.msra.mxu0 0.0
        %776 = vmatprep.subr.mxu0 0.0
        %777 = vmatpush1.msra.mxu0 0.0
        %778 = vmatprep.subr.mxu0 0.0
        %779 = vmatpush1.msra.mxu0 0.0
        %780 = vmatprep.subr.mxu0 0.0
        %781 = vmatpush1.msra.mxu0 0.0
        %782 = vmatprep.subr.mxu0 0.0
        %783 = vmatpush1.msra.mxu0 0.0
        %784 = vmatprep.subr.mxu0 0.0
        %785 = vmatpush1.msra.mxu0 0.0
        %786 = vmatprep.subr.mxu0 0.0
        %787 = vmatpush1.msra.mxu0 0.0
        %788 = vmatprep.subr.mxu0 0.0
        %789 = vmatpush1.msra.mxu0 0.0
        %790 = vmatprep.subr.mxu0 0.0
        %791 = vmatpush1.msra.mxu0 0.0
        %792 = vmatprep.subr.mxu0 0.0
        %793 = vmatpush1.msra.mxu0 0.0
        %794 = vmatprep.subr.mxu0 0.0
        %795 = vmatpush1.msra.mxu0 0.0
        %796 = vmatprep.subr.mxu0 0.0
        %797 = vmatpush1.msra.mxu0 0.0
        %798 = vmatprep.subr.mxu0 0.0
        %799 = vmatpush1.msra.mxu0 0.0
        %800 = vmatprep.subr.mxu0 0.0
        %801 = vmatpush1.msra.mxu0 0.0
        %802 = vmatprep.subr.mxu0 0.0
        %803 = vmatpush1.msra.mxu0 0.0
        %804 = vmatprep.subr.mxu0 0.0
        %805 = vmatpush1.msra.mxu0 0.0
        %806 = vmatprep.subr.mxu0 0.0
        %807 = vmatpush1.msra.mxu0 0.0
        %808 = vmatprep.subr.mxu0 0.0
        %809 = vmatpush1.msra.mxu0 0.0
        %810 = vmatprep.subr.mxu0 0.0
        %811 = vmatpush1.msra.mxu0 0.0
        %812 = vmatprep.subr.mxu0 0.0
        %813 = vmatpush1.msra.mxu0 0.0
        %814 = vmatprep.subr.mxu0 0.0
        %815 = vmatpush1.msra.mxu0 0.0
        %816 = vmatprep.mubr.f32.mxu0 0.0
        %817 = vmatmul.mubr.f32.gmra.mrb[0].mxu0 %v342
        %v818 = vpop.f32.mrb[0].mxu0
        %v819 = vadd.f32 %v750, %v818
        %v820 = vpop.f32.mrb[0].mxu0
        %821 = vdwg.mxu0
        %s822 = scalar_lea.vmem %s3, 32
        %v823 = vld [vmem:[%s822] sm:$0xff]
        %v824 = vld [vmem:[%s822 + $0x8] sm:$0xff]
        %v825 = vld [vmem:[%s822 + $0x10] sm:$0xff]
        %v826 = vld [vmem:[%s822 + $0x18] sm:$0xff]
        %s827 = scalar_lea.vmem %s4, 1
        %v828 = vld [vmem:[%s827] sm:$0x1]
        %v830 = vlaneseq
        %v831 = vshrl.u32 %v830, 7
        %v832 = vsub.s32 0, %v831
        %v833 = vrot.slane %v828, %v832
        %835 = vmatprep.subr.mxu0 0.0
        %836 = vmatpush1.msra.mxu0 %v823
        %837 = vmatprep.subr.mxu0 0.0
        %838 = vmatpush1.msra.mxu0 %v824
        %839 = vmatprep.subr.mxu0 0.0
        %840 = vmatpush1.msra.mxu0 %v825
        %841 = vmatprep.subr.mxu0 0.0
        %842 = vmatpush1.msra.mxu0 %v826
        %843 = vmatprep.subr.mxu0 0.0
        %844 = vmatpush1.msra.mxu0 0.0
        %845 = vmatprep.subr.mxu0 0.0
        %846 = vmatpush1.msra.mxu0 0.0
        %847 = vmatprep.subr.mxu0 0.0
        %848 = vmatpush1.msra.mxu0 0.0
        %849 = vmatprep.subr.mxu0 0.0
        %850 = vmatpush1.msra.mxu0 0.0
        %851 = vmatprep.subr.mxu0 0.0
        %852 = vmatpush1.msra.mxu0 0.0
        %853 = vmatprep.subr.mxu0 0.0
        %854 = vmatpush1.msra.mxu0 0.0
        %855 = vmatprep.subr.mxu0 0.0
        %856 = vmatpush1.msra.mxu0 0.0
        %857 = vmatprep.subr.mxu0 0.0
        %858 = vmatpush1.msra.mxu0 0.0
        %859 = vmatprep.subr.mxu0 0.0
        %860 = vmatpush1.msra.mxu0 0.0
        %861 = vmatprep.subr.mxu0 0.0
        %862 = vmatpush1.msra.mxu0 0.0
        %863 = vmatprep.subr.mxu0 0.0
        %864 = vmatpush1.msra.mxu0 0.0
        %865 = vmatprep.subr.mxu0 0.0
        %866 = vmatpush1.msra.mxu0 0.0
        %867 = vmatprep.subr.mxu0 0.0
        %868 = vmatpush1.msra.mxu0 0.0
        %869 = vmatprep.subr.mxu0 0.0
        %870 = vmatpush1.msra.mxu0 0.0
        %871 = vmatprep.subr.mxu0 0.0
        %872 = vmatpush1.msra.mxu0 0.0
        %873 = vmatprep.subr.mxu0 0.0
        %874 = vmatpush1.msra.mxu0 0.0
        %875 = vmatprep.subr.mxu0 0.0
        %876 = vmatpush1.msra.mxu0 0.0
        %877 = vmatprep.subr.mxu0 0.0
        %878 = vmatpush1.msra.mxu0 0.0
        %879 = vmatprep.subr.mxu0 0.0
        %880 = vmatpush1.msra.mxu0 0.0
        %881 = vmatprep.subr.mxu0 0.0
        %882 = vmatpush1.msra.mxu0 0.0
        %883 = vmatprep.subr.mxu0 0.0
        %884 = vmatpush1.msra.mxu0 0.0
        %885 = vmatprep.subr.mxu0 0.0
        %886 = vmatpush1.msra.mxu0 0.0
        %887 = vmatprep.subr.mxu0 0.0
        %888 = vmatpush1.msra.mxu0 0.0
        %889 = vmatprep.subr.mxu0 0.0
        %890 = vmatpush1.msra.mxu0 0.0
        %891 = vmatprep.subr.mxu0 0.0
        %892 = vmatpush1.msra.mxu0 0.0
        %893 = vmatprep.subr.mxu0 0.0
        %894 = vmatpush1.msra.mxu0 0.0
        %895 = vmatprep.subr.mxu0 0.0
        %896 = vmatpush1.msra.mxu0 0.0
        %897 = vmatprep.subr.mxu0 0.0
        %898 = vmatpush1.msra.mxu0 0.0
        %899 = vmatprep.mubr.f32.mxu0 0.0
        %900 = vmatmul.mubr.f32.gmra.mrb[0].mxu0 %v342
        %v901 = vpop.f32.mrb[0].mxu0
        %v902 = vadd.f32 %v833, %v901
        %v903 = vpop.f32.mrb[0].mxu0
        %904 = vdwg.mxu0
        %s905 = scalar_lea.vmem %s5, 32
        %v906 = vld [vmem:[%s905] sm:$0xff]
        %v907 = vld [vmem:[%s905 + $0x8] sm:$0xff]
        %v908 = vld [vmem:[%s905 + $0x10] sm:$0xff]
        %v909 = vld [vmem:[%s905 + $0x18] sm:$0xff]
        %s910 = scalar_lea.vmem %s6, 1
        %v911 = vld [vmem:[%s910] sm:$0x1]
        %v913 = vlaneseq
        %v914 = vshrl.u32 %v913, 7
        %v915 = vsub.s32 0, %v914
        %v916 = vrot.slane %v911, %v915
        %918 = vmatprep.subr.mxu0 0.0
        %919 = vmatpush1.msra.mxu0 %v906
        %920 = vmatprep.subr.mxu0 0.0
        %921 = vmatpush1.msra.mxu0 %v907
        %922 = vmatprep.subr.mxu0 0.0
        %923 = vmatpush1.msra.mxu0 %v908
        %924 = vmatprep.subr.mxu0 0.0
        %925 = vmatpush1.msra.mxu0 %v909
        %926 = vmatprep.subr.mxu0 0.0
        %927 = vmatpush1.msra.mxu0 0.0
        %928 = vmatprep.subr.mxu0 0.0
        %929 = vmatpush1.msra.mxu0 0.0
        %930 = vmatprep.subr.mxu0 0.0
        %931 = vmatpush1.msra.mxu0 0.0
        %932 = vmatprep.subr.mxu0 0.0
        %933 = vmatpush1.msra.mxu0 0.0
        %934 = vmatprep.subr.mxu0 0.0
        %935 = vmatpush1.msra.mxu0 0.0
        %936 = vmatprep.subr.mxu0 0.0
        %937 = vmatpush1.msra.mxu0 0.0
        %938 = vmatprep.subr.mxu0 0.0
        %939 = vmatpush1.msra.mxu0 0.0
        %940 = vmatprep.subr.mxu0 0.0
        %941 = vmatpush1.msra.mxu0 0.0
        %942 = vmatprep.subr.mxu0 0.0
        %943 = vmatpush1.msra.mxu0 0.0
        %944 = vmatprep.subr.mxu0 0.0
        %945 = vmatpush1.msra.mxu0 0.0
        %946 = vmatprep.subr.mxu0 0.0
        %947 = vmatpush1.msra.mxu0 0.0
        %948 = vmatprep.subr.mxu0 0.0
        %949 = vmatpush1.msra.mxu0 0.0
        %950 = vmatprep.subr.mxu0 0.0
        %951 = vmatpush1.msra.mxu0 0.0
        %952 = vmatprep.subr.mxu0 0.0
        %953 = vmatpush1.msra.mxu0 0.0
        %954 = vmatprep.subr.mxu0 0.0
        %955 = vmatpush1.msra.mxu0 0.0
        %956 = vmatprep.subr.mxu0 0.0
        %957 = vmatpush1.msra.mxu0 0.0
        %958 = vmatprep.subr.mxu0 0.0
        %959 = vmatpush1.msra.mxu0 0.0
        %960 = vmatprep.subr.mxu0 0.0
        %961 = vmatpush1.msra.mxu0 0.0
        %962 = vmatprep.subr.mxu0 0.0
        %963 = vmatpush1.msra.mxu0 0.0
        %964 = vmatprep.subr.mxu0 0.0
        %965 = vmatpush1.msra.mxu0 0.0
        %966 = vmatprep.subr.mxu0 0.0
        %967 = vmatpush1.msra.mxu0 0.0
        %968 = vmatprep.subr.mxu0 0.0
        %969 = vmatpush1.msra.mxu0 0.0
        %970 = vmatprep.subr.mxu0 0.0
        %971 = vmatpush1.msra.mxu0 0.0
        %972 = vmatprep.subr.mxu0 0.0
        %973 = vmatpush1.msra.mxu0 0.0
        %974 = vmatprep.subr.mxu0 0.0
        %975 = vmatpush1.msra.mxu0 0.0
        %976 = vmatprep.subr.mxu0 0.0
        %977 = vmatpush1.msra.mxu0 0.0
        %978 = vmatprep.subr.mxu0 0.0
        %979 = vmatpush1.msra.mxu0 0.0
        %980 = vmatprep.subr.mxu0 0.0
        %981 = vmatpush1.msra.mxu0 0.0
        %982 = vmatprep.mubr.f32.mxu0 0.0
        %983 = vmatmul.mubr.f32.gmra.mrb[0].mxu0 %v342
        %v984 = vpop.f32.mrb[0].mxu0
        %v985 = vadd.f32 %v916, %v984
        %v986 = vpop.f32.mrb[0].mxu0
        %987 = vdwg.mxu0
        %v989 = vsel %vm576, %v819, 0
        %v992 = vsel %vm576, %v902, 0
        %994 = vmatprep.subr.mxu0 0.0
        %995 = vmatpush1.xpose.msra.mxu0 %v992
        %996 = vmatprep.subr.mxu0 0.0
        %997 = vmatpush1.xpose.msra.mxu0 0.0
        %998 = vmatprep.subr.mxu0 0.0
        %999 = vmatpush1.xpose.msra.mxu0 0.0
        %1000 = vmatprep.subr.mxu0 0.0
        %1001 = vmatpush1.xpose.msra.mxu0 0.0
        %1002 = vmatprep.subr.mxu0 0.0
        %1003 = vmatpush1.xpose.msra.mxu0 0.0
        %1004 = vmatprep.subr.mxu0 0.0
        %1005 = vmatpush1.xpose.msra.mxu0 0.0
        %1006 = vmatprep.subr.mxu0 0.0
        %1007 = vmatpush1.xpose.msra.mxu0 0.0
        %1008 = vmatprep.subr.mxu0 0.0
        %1009 = vmatpush1.xpose.msra.mxu0 0.0
        %1010 = vmatprep.subr.mxu0 0.0
        %1011 = vmatpush1.xpose.msra.mxu0 0.0
        %1012 = vmatprep.subr.mxu0 0.0
        %1013 = vmatpush1.xpose.msra.mxu0 0.0
        %1014 = vmatprep.subr.mxu0 0.0
        %1015 = vmatpush1.xpose.msra.mxu0 0.0
        %1016 = vmatprep.subr.mxu0 0.0
        %1017 = vmatpush1.xpose.msra.mxu0 0.0
        %1018 = vmatprep.subr.mxu0 0.0
        %1019 = vmatpush1.xpose.msra.mxu0 0.0
        %1020 = vmatprep.subr.mxu0 0.0
        %1021 = vmatpush1.xpose.msra.mxu0 0.0
        %1022 = vmatprep.subr.mxu0 0.0
        %1023 = vmatpush1.xpose.msra.mxu0 0.0
        %1024 = vmatprep.subr.mxu0 0.0
        %1025 = vmatpush1.xpose.msra.mxu0 0.0
        %1026 = vmatprep.subr.mxu0 0.0
        %1027 = vmatpush1.xpose.msra.mxu0 0.0
        %1028 = vmatprep.subr.mxu0 0.0
        %1029 = vmatpush1.xpose.msra.mxu0 0.0
        %1030 = vmatprep.subr.mxu0 0.0
        %1031 = vmatpush1.xpose.msra.mxu0 0.0
        %1032 = vmatprep.subr.mxu0 0.0
        %1033 = vmatpush1.xpose.msra.mxu0 0.0
        %1034 = vmatprep.subr.mxu0 0.0
        %1035 = vmatpush1.xpose.msra.mxu0 0.0
        %1036 = vmatprep.subr.mxu0 0.0
        %1037 = vmatpush1.xpose.msra.mxu0 0.0
        %1038 = vmatprep.subr.mxu0 0.0
        %1039 = vmatpush1.xpose.msra.mxu0 0.0
        %1040 = vmatprep.subr.mxu0 0.0
        %1041 = vmatpush1.xpose.msra.mxu0 0.0
        %1042 = vmatprep.subr.mxu0 0.0
        %1043 = vmatpush1.xpose.msra.mxu0 0.0
        %1044 = vmatprep.subr.mxu0 0.0
        %1045 = vmatpush1.xpose.msra.mxu0 0.0
        %1046 = vmatprep.subr.mxu0 0.0
        %1047 = vmatpush1.xpose.msra.mxu0 0.0
        %1048 = vmatprep.subr.mxu0 0.0
        %1049 = vmatpush1.xpose.msra.mxu0 0.0
        %1050 = vmatprep.subr.mxu0 0.0
        %1051 = vmatpush1.xpose.msra.mxu0 0.0
        %1052 = vmatprep.subr.mxu0 0.0
        %1053 = vmatpush1.xpose.msra.mxu0 0.0
        %1054 = vmatprep.subr.mxu0 0.0
        %1055 = vmatpush1.xpose.msra.mxu0 0.0
        %1056 = vmatprep.subr.mxu0 0.0
        %1057 = vmatpush1.xpose.msra.mxu0 0.0
        %1058 = vmatprep.mubr.f32.mxu0 0.0
        %1059 = vmatmul.mubr.f32.gmra.mrb[0].mxu0 %v989
        %v1060 = vpop.f32.mrb[0].mxu0
        %v1061 = vadd.f32 0.0, %v1060
        %v1062 = vpop.f32.mrb[0].mxu0
        %1063 = vdwg.mxu0
        %v1064 = vmul.f32 %v1061, 0.35355338
        %v1065 = vsel %vm576, %v1064, -inf
        %1066 = vmax.xlane.f32.xlu0 %v1065
        %v1067 = vpop.xlane.xlu0 %1066
        %v1068 = vsub.f32 %v1064, %v1067
        %v1069 = vmul.f32 %v1068, 1.442695
        %v1070 = vpow.pop %v1069
        %v1071 = vsel %vm576, %v1070, 0.0
        %1072 = vadd.xlane.f32.xlu0 %v1071
        %v1073 = vpop.xlane.xlu0 %1072
        %v1074 = vrcp.pop %v1073
        %v1075 = vmul.f32 %v1070, %v1074
        %v1077 = vsel %vm576, %v1075, 0
        %1079 = vmatprep.subr.mxu0 0.0
        %1080 = vmatpush1.msra.mxu0 %v985
        %1081 = vmatprep.subr.mxu0 0.0
        %1082 = vmatpush1.msra.mxu0 0.0
        %1083 = vmatprep.subr.mxu0 0.0
        %1084 = vmatpush1.msra.mxu0 0.0
        %1085 = vmatprep.subr.mxu0 0.0
        %1086 = vmatpush1.msra.mxu0 0.0
        %1087 = vmatprep.subr.mxu0 0.0
        %1088 = vmatpush1.msra.mxu0 0.0
        %1089 = vmatprep.subr.mxu0 0.0
        %1090 = vmatpush1.msra.mxu0 0.0
        %1091 = vmatprep.subr.mxu0 0.0
        %1092 = vmatpush1.msra.mxu0 0.0
        %1093 = vmatprep.subr.mxu0 0.0
        %1094 = vmatpush1.msra.mxu0 0.0
        %1095 = vmatprep.subr.mxu0 0.0
        %1096 = vmatpush1.msra.mxu0 0.0
        %1097 = vmatprep.subr.mxu0 0.0
        %1098 = vmatpush1.msra.mxu0 0.0
        %1099 = vmatprep.subr.mxu0 0.0
        %1100 = vmatpush1.msra.mxu0 0.0
        %1101 = vmatprep.subr.mxu0 0.0
        %1102 = vmatpush1.msra.mxu0 0.0
        %1103 = vmatprep.subr.mxu0 0.0
        %1104 = vmatpush1.msra.mxu0 0.0
        %1105 = vmatprep.subr.mxu0 0.0
        %1106 = vmatpush1.msra.mxu0 0.0
        %1107 = vmatprep.subr.mxu0 0.0
        %1108 = vmatpush1.msra.mxu0 0.0
        %1109 = vmatprep.subr.mxu0 0.0
        %1110 = vmatpush1.msra.mxu0 0.0
        %1111 = vmatprep.subr.mxu0 0.0
        %1112 = vmatpush1.msra.mxu0 0.0
        %1113 = vmatprep.subr.mxu0 0.0
        %1114 = vmatpush1.msra.mxu0 0.0
        %1115 = vmatprep.subr.mxu0 0.0
        %1116 = vmatpush1.msra.mxu0 0.0
        %1117 = vmatprep.subr.mxu0 0.0
        %1118 = vmatpush1.msra.mxu0 0.0
        %1119 = vmatprep.subr.mxu0 0.0
        %1120 = vmatpush1.msra.mxu0 0.0
        %1121 = vmatprep.subr.mxu0 0.0
        %1122 = vmatpush1.msra.mxu0 0.0
        %1123 = vmatprep.subr.mxu0 0.0
        %1124 = vmatpush1.msra.mxu0 0.0
        %1125 = vmatprep.subr.mxu0 0.0
        %1126 = vmatpush1.msra.mxu0 0.0
        %1127 = vmatprep.subr.mxu0 0.0
        %1128 = vmatpush1.msra.mxu0 0.0
        %1129 = vmatprep.subr.mxu0 0.0
        %1130 = vmatpush1.msra.mxu0 0.0
        %1131 = vmatprep.subr.mxu0 0.0
        %1132 = vmatpush1.msra.mxu0 0.0
        %1133 = vmatprep.subr.mxu0 0.0
        %1134 = vmatpush1.msra.mxu0 0.0
        %1135 = vmatprep.subr.mxu0 0.0
        %1136 = vmatpush1.msra.mxu0 0.0
        %1137 = vmatprep.subr.mxu0 0.0
        %1138 = vmatpush1.msra.mxu0 0.0
        %1139 = vmatprep.subr.mxu0 0.0
        %1140 = vmatpush1.msra.mxu0 0.0
        %1141 = vmatprep.subr.mxu0 0.0
        %1142 = vmatpush1.msra.mxu0 0.0
        %1143 = vmatprep.mubr.f32.mxu0 0.0
        %1144 = vmatmul.mubr.f32.gmra.mrb[0].mxu0 %v1077
        %v1145 = vpop.f32.mrb[0].mxu0
        %v1146 = vadd.f32 0.0, %v1145
        %v1147 = vpop.f32.mrb[0].mxu0
        %1148 = vdwg.mxu0
        %s1149 = scalar_lea.vmem %s7, 8
        %v1150 = vld [vmem:[%s1149] sm:$0xff]
        %v1152 = vsel %vm576, %v1146, 0
        %1154 = vmatprep.subr.mxu0 0.0
        %1155 = vmatpush1.msra.mxu0 %v1150
        %1156 = vmatprep.subr.mxu0 0.0
        %1157 = vmatpush1.msra.mxu0 0.0
        %1158 = vmatprep.subr.mxu0 0.0
        %1159 = vmatpush1.msra.mxu0 0.0
        %1160 = vmatprep.subr.mxu0 0.0
        %1161 = vmatpush1.msra.mxu0 0.0
        %1162 = vmatprep.subr.mxu0 0.0
        %1163 = vmatpush1.msra.mxu0 0.0
        %1164 = vmatprep.subr.mxu0 0.0
        %1165 = vmatpush1.msra.mxu0 0.0
        %1166 = vmatprep.subr.mxu0 0.0
        %1167 = vmatpush1.msra.mxu0 0.0
        %1168 = vmatprep.subr.mxu0 0.0
        %1169 = vmatpush1.msra.mxu0 0.0
        %1170 = vmatprep.subr.mxu0 0.0
        %1171 = vmatpush1.msra.mxu0 0.0
        %1172 = vmatprep.subr.mxu0 0.0
        %1173 = vmatpush1.msra.mxu0 0.0
        %1174 = vmatprep.subr.mxu0 0.0
        %1175 = vmatpush1.msra.mxu0 0.0
        %1176 = vmatprep.subr.mxu0 0.0
        %1177 = vmatpush1.msra.mxu0 0.0
        %1178 = vmatprep.subr.mxu0 0.0
        %1179 = vmatpush1.msra.mxu0 0.0
        %1180 = vmatprep.subr.mxu0 0.0
        %1181 = vmatpush1.msra.mxu0 0.0
        %1182 = vmatprep.subr.mxu0 0.0
        %1183 = vmatpush1.msra.mxu0 0.0
        %1184 = vmatprep.subr.mxu0 0.0
        %1185 = vmatpush1.msra.mxu0 0.0
        %1186 = vmatprep.subr.mxu0 0.0
        %1187 = vmatpush1.msra.mxu0 0.0
        %1188 = vmatprep.subr.mxu0 0.0
        %1189 = vmatpush1.msra.mxu0 0.0
        %1190 = vmatprep.subr.mxu0 0.0
        %1191 = vmatpush1.msra.mxu0 0.0
        %1192 = vmatprep.subr.mxu0 0.0
        %1193 = vmatpush1.msra.mxu0 0.0
        %1194 = vmatprep.subr.mxu0 0.0
        %1195 = vmatpush1.msra.mxu0 0.0
        %1196 = vmatprep.subr.mxu0 0.0
        %1197 = vmatpush1.msra.mxu0 0.0
        %1198 = vmatprep.subr.mxu0 0.0
        %1199 = vmatpush1.msra.mxu0 0.0
        %1200 = vmatprep.subr.mxu0 0.0
        %1201 = vmatpush1.msra.mxu0 0.0
        %1202 = vmatprep.subr.mxu0 0.0
        %1203 = vmatpush1.msra.mxu0 0.0
        %1204 = vmatprep.subr.mxu0 0.0
        %1205 = vmatpush1.msra.mxu0 0.0
        %1206 = vmatprep.subr.mxu0 0.0
        %1207 = vmatpush1.msra.mxu0 0.0
        %1208 = vmatprep.subr.mxu0 0.0
        %1209 = vmatpush1.msra.mxu0 0.0
        %1210 = vmatprep.subr.mxu0 0.0
        %1211 = vmatpush1.msra.mxu0 0.0
        %1212 = vmatprep.subr.mxu0 0.0
        %1213 = vmatpush1.msra.mxu0 0.0
        %1214 = vmatprep.subr.mxu0 0.0
        %1215 = vmatpush1.msra.mxu0 0.0
        %1216 = vmatprep.subr.mxu0 0.0
        %1217 = vmatpush1.msra.mxu0 0.0
        %1218 = vmatprep.mubr.f32.mxu0 0.0
        %1219 = vmatmul.mubr.f32.gmra.mrb[0].mxu0 %v1152
        %v1220 = vpop.f32.mrb[0].mxu0
        %v1221 = vadd.f32 0.0, %v1220
        %v1222 = vpop.f32.mrb[0].mxu0
        %1223 = vdwg.mxu0
        %v1225 = vsel %vm576, %v735, 0
        %1227 = vmatprep.subr.mxu0 0.0
        %1228 = vmatpush1.msra.mxu0 %v738
        %1229 = vmatprep.subr.mxu0 0.0
        %1230 = vmatpush1.msra.mxu0 0.0
        %1231 = vmatprep.subr.mxu0 0.0
        %1232 = vmatpush1.msra.mxu0 0.0
        %1233 = vmatprep.subr.mxu0 0.0
        %1234 = vmatpush1.msra.mxu0 0.0
        %1235 = vmatprep.subr.mxu0 0.0
        %1236 = vmatpush1.msra.mxu0 0.0
        %1237 = vmatprep.subr.mxu0 0.0
        %1238 = vmatpush1.msra.mxu0 0.0
        %1239 = vmatprep.subr.mxu0 0.0
        %1240 = vmatpush1.msra.mxu0 0.0
        %1241 = vmatprep.subr.mxu0 0.0
        %1242 = vmatpush1.msra.mxu0 0.0
        %1243 = vmatprep.subr.mxu0 0.0
        %1244 = vmatpush1.msra.mxu0 0.0
        %1245 = vmatprep.subr.mxu0 0.0
        %1246 = vmatpush1.msra.mxu0 0.0
        %1247 = vmatprep.subr.mxu0 0.0
        %1248 = vmatpush1.msra.mxu0 0.0
        %1249 = vmatprep.subr.mxu0 0.0
        %1250 = vmatpush1.msra.mxu0 0.0
        %1251 = vmatprep.subr.mxu0 0.0
        %1252 = vmatpush1.msra.mxu0 0.0
        %1253 = vmatprep.subr.mxu0 0.0
        %1254 = vmatpush1.msra.mxu0 0.0
        %1255 = vmatprep.subr.mxu0 0.0
        %1256 = vmatpush1.msra.mxu0 0.0
        %1257 = vmatprep.subr.mxu0 0.0
        %1258 = vmatpush1.msra.mxu0 0.0
        %1259 = vmatprep.subr.mxu0 0.0
        %1260 = vmatpush1.msra.mxu0 0.0
        %1261 = vmatprep.subr.mxu0 0.0
        %1262 = vmatpush1.msra.mxu0 0.0
        %1263 = vmatprep.subr.mxu0 0.0
        %1264 = vmatpush1.msra.mxu0 0.0
        %1265 = vmatprep.subr.mxu0 0.0
        %1266 = vmatpush1.msra.mxu0 0.0
        %1267 = vmatprep.subr.mxu0 0.0
        %1268 = vmatpush1.msra.mxu0 0.0
        %1269 = vmatprep.subr.mxu0 0.0
        %1270 = vmatpush1.msra.mxu0 0.0
        %1271 = vmatprep.subr.mxu0 0.0
        %1272 = vmatpush1.msra.mxu0 0.0
        %1273 = vmatprep.subr.mxu0 0.0
        %1274 = vmatpush1.msra.mxu0 0.0
        %1275 = vmatprep.subr.mxu0 0.0
        %1276 = vmatpush1.msra.mxu0 0.0
        %1277 = vmatprep.subr.mxu0 0.0
        %1278 = vmatpush1.msra.mxu0 0.0
        %1279 = vmatprep.subr.mxu0 0.0
        %1280 = vmatpush1.msra.mxu0 0.0
        %1281 = vmatprep.subr.mxu0 0.0
        %1282 = vmatpush1.msra.mxu0 0.0
        %1283 = vmatprep.subr.mxu0 0.0
        %1284 = vmatpush1.msra.mxu0 0.0
        %1285 = vmatprep.subr.mxu0 0.0
        %1286 = vmatpush1.msra.mxu0 0.0
        %1287 = vmatprep.subr.mxu0 0.0
        %1288 = vmatpush1.msra.mxu0 0.0
        %1289 = vmatprep.subr.mxu0 0.0
        %1290 = vmatpush1.msra.mxu0 0.0
        %1291 = vmatprep.mubr.f32.mxu0 0.0
        %1292 = vmatmul.mubr.f32.gmra.mrb[0].mxu0 %v1225
        %v1293 = vpop.f32.mrb[0].mxu0
        %v1294 = vadd.f32 %v1221, %v1293
        %v1295 = vpop.f32.mrb[0].mxu0
        %1296 = vdwg.mxu0
        %s1297 = scalar_lea.vmem %s1, 64
        %v1298 = vld [vmem:[%s1297] sm:$0xff]
        %v1299 = vld [vmem:[%s1297 + $0x8] sm:$0xff]
        %v1300 = vld [vmem:[%s1297 + $0x10] sm:$0xff]
        %v1301 = vld [vmem:[%s1297 + $0x18] sm:$0xff]
        %s1302 = scalar_lea.vmem %s2, 2
        %v1303 = vld [vmem:[%s1302] sm:$0x1]
        %v1305 = vlaneseq
        %v1306 = vshrl.u32 %v1305, 7
        %v1307 = vsub.s32 0, %v1306
        %v1308 = vrot.slane %v1303, %v1307
        %1310 = vmatprep.subr.mxu0 0.0
        %1311 = vmatpush1.msra.mxu0 %v1298
        %1312 = vmatprep.subr.mxu0 0.0
        %1313 = vmatpush1.msra.mxu0 %v1299
        %1314 = vmatprep.subr.mxu0 0.0
        %1315 = vmatpush1.msra.mxu0 %v1300
        %1316 = vmatprep.subr.mxu0 0.0
        %1317 = vmatpush1.msra.mxu0 %v1301
        %1318 = vmatprep.subr.mxu0 0.0
        %1319 = vmatpush1.msra.mxu0 0.0
        %1320 = vmatprep.subr.mxu0 0.0
        %1321 = vmatpush1.msra.mxu0 0.0
        %1322 = vmatprep.subr.mxu0 0.0
        %1323 = vmatpush1.msra.mxu0 0.0
        %1324 = vmatprep.subr.mxu0 0.0
        %1325 = vmatpush1.msra.mxu0 0.0
        %1326 = vmatprep.subr.mxu0 0.0
        %1327 = vmatpush1.msra.mxu0 0.0
        %1328 = vmatprep.subr.mxu0 0.0
        %1329 = vmatpush1.msra.mxu0 0.0
        %1330 = vmatprep.subr.mxu0 0.0
        %1331 = vmatpush1.msra.mxu0 0.0
        %1332 = vmatprep.subr.mxu0 0.0
        %1333 = vmatpush1.msra.mxu0 0.0
        %1334 = vmatprep.subr.mxu0 0.0
        %1335 = vmatpush1.msra.mxu0 0.0
        %1336 = vmatprep.subr.mxu0 0.0
        %1337 = vmatpush1.msra.mxu0 0.0
        %1338 = vmatprep.subr.mxu0 0.0
        %1339 = vmatpush1.msra.mxu0 0.0
        %1340 = vmatprep.subr.mxu0 0.0
        %1341 = vmatpush1.msra.mxu0 0.0
        %1342 = vmatprep.subr.mxu0 0.0
        %1343 = vmatpush1.msra.mxu0 0.0
        %1344 = vmatprep.subr.mxu0 0.0
        %1345 = vmatpush1.msra.mxu0 0.0
        %1346 = vmatprep.subr.mxu0 0.0
        %1347 = vmatpush1.msra.mxu0 0.0
        %1348 = vmatprep.subr.mxu0 0.0
        %1349 = vmatpush1.msra.mxu0 0.0
        %1350 = vmatprep.subr.mxu0 0.0
        %1351 = vmatpush1.msra.mxu0 0.0
        %1352 = vmatprep.subr.mxu0 0.0
        %1353 = vmatpush1.msra.mxu0 0.0
        %1354 = vmatprep.subr.mxu0 0.0
        %1355 = vmatpush1.msra.mxu0 0.0
        %1356 = vmatprep.subr.mxu0 0.0
        %1357 = vmatpush1.msra.mxu0 0.0
        %1358 = vmatprep.subr.mxu0 0.0
        %1359 = vmatpush1.msra.mxu0 0.0
        %1360 = vmatprep.subr.mxu0 0.0
        %1361 = vmatpush1.msra.mxu0 0.0
        %1362 = vmatprep.subr.mxu0 0.0
        %1363 = vmatpush1.msra.mxu0 0.0
        %1364 = vmatprep.subr.mxu0 0.0
        %1365 = vmatpush1.msra.mxu0 0.0
        %1366 = vmatprep.subr.mxu0 0.0
        %1367 = vmatpush1.msra.mxu0 0.0
        %1368 = vmatprep.subr.mxu0 0.0
        %1369 = vmatpush1.msra.mxu0 0.0
        %1370 = vmatprep.subr.mxu0 0.0
        %1371 = vmatpush1.msra.mxu0 0.0
        %1372 = vmatprep.subr.mxu0 0.0
        %1373 = vmatpush1.msra.mxu0 0.0
        %1374 = vmatprep.mubr.f32.mxu0 0.0
        %1375 = vmatmul.mubr.f32.gmra.mrb[0].mxu0 %v342
        %v1376 = vpop.f32.mrb[0].mxu0
        %v1377 = vadd.f32 %v1308, %v1376
        %v1378 = vpop.f32.mrb[0].mxu0
        %1379 = vdwg.mxu0
        %s1380 = scalar_lea.vmem %s3, 64
        %v1381 = vld [vmem:[%s1380] sm:$0xff]
        %v1382 = vld [vmem:[%s1380 + $0x8] sm:$0xff]
        %v1383 = vld [vmem:[%s1380 + $0x10] sm:$0xff]
        %v1384 = vld [vmem:[%s1380 + $0x18] sm:$0xff]
        %s1385 = scalar_lea.vmem %s4, 2
        %v1386 = vld [vmem:[%s1385] sm:$0x1]
        %v1388 = vlaneseq
        %v1389 = vshrl.u32 %v1388, 7
        %v1390 = vsub.s32 0, %v1389
        %v1391 = vrot.slane %v1386, %v1390
        %1393 = vmatprep.subr.mxu0 0.0
        %1394 = vmatpush1.msra.mxu0 %v1381
        %1395 = vmatprep.subr.mxu0 0.0
        %1396 = vmatpush1.msra.mxu0 %v1382
        %1397 = vmatprep.subr.mxu0 0.0
        %1398 = vmatpush1.msra.mxu0 %v1383
        %1399 = vmatprep.subr.mxu0 0.0
        %1400 = vmatpush1.msra.mxu0 %v1384
        %1401 = vmatprep.subr.mxu0 0.0
        %1402 = vmatpush1.msra.mxu0 0.0
        %1403 = vmatprep.subr.mxu0 0.0
        %1404 = vmatpush1.msra.mxu0 0.0
        %1405 = vmatprep.subr.mxu0 0.0
        %1406 = vmatpush1.msra.mxu0 0.0
        %1407 = vmatprep.subr.mxu0 0.0
        %1408 = vmatpush1.msra.mxu0 0.0
        %1409 = vmatprep.subr.mxu0 0.0
        %1410 = vmatpush1.msra.mxu0 0.0
        %1411 = vmatprep.subr.mxu0 0.0
        %1412 = vmatpush1.msra.mxu0 0.0
        %1413 = vmatprep.subr.mxu0 0.0
        %1414 = vmatpush1.msra.mxu0 0.0
        %1415 = vmatprep.subr.mxu0 0.0
        %1416 = vmatpush1.msra.mxu0 0.0
        %1417 = vmatprep.subr.mxu0 0.0
        %1418 = vmatpush1.msra.mxu0 0.0
        %1419 = vmatprep.subr.mxu0 0.0
        %1420 = vmatpush1.msra.mxu0 0.0
        %1421 = vmatprep.subr.mxu0 0.0
        %1422 = vmatpush1.msra.mxu0 0.0
        %1423 = vmatprep.subr.mxu0 0.0
        %1424 = vmatpush1.msra.mxu0 0.0
        %1425 = vmatprep.subr.mxu0 0.0
        %1426 = vmatpush1.msra.mxu0 0.0
        %1427 = vmatprep.subr.mxu0 0.0
        %1428 = vmatpush1.msra.mxu0 0.0
        %1429 = vmatprep.subr.mxu0 0.0
        %1430 = vmatpush1.msra.mxu0 0.0
        %1431 = vmatprep.subr.mxu0 0.0
        %1432 = vmatpush1.msra.mxu0 0.0
        %1433 = vmatprep.subr.mxu0 0.0
        %1434 = vmatpush1.msra.mxu0 0.0
        %1435 = vmatprep.subr.mxu0 0.0
        %1436 = vmatpush1.msra.mxu0 0.0
        %1437 = vmatprep.subr.mxu0 0.0
        %1438 = vmatpush1.msra.mxu0 0.0
        %1439 = vmatprep.subr.mxu0 0.0
        %1440 = vmatpush1.msra.mxu0 0.0
        %1441 = vmatprep.subr.mxu0 0.0
        %1442 = vmatpush1.msra.mxu0 0.0
        %1443 = vmatprep.subr.mxu0 0.0
        %1444 = vmatpush1.msra.mxu0 0.0
        %1445 = vmatprep.subr.mxu0 0.0
        %1446 = vmatpush1.msra.mxu0 0.0
        %1447 = vmatprep.subr.mxu0 0.0
        %1448 = vmatpush1.msra.mxu0 0.0
        %1449 = vmatprep.subr.mxu0 0.0
        %1450 = vmatpush1.msra.mxu0 0.0
        %1451 = vmatprep.subr.mxu0 0.0
        %1452 = vmatpush1.msra.mxu0 0.0
        %1453 = vmatprep.subr.mxu0 0.0
        %1454 = vmatpush1.msra.mxu0 0.0
        %1455 = vmatprep.subr.mxu0 0.0
        %1456 = vmatpush1.msra.mxu0 0.0
        %1457 = vmatprep.mubr.f32.mxu0 0.0
        %1458 = vmatmul.mubr.f32.gmra.mrb[0].mxu0 %v342
        %v1459 = vpop.f32.mrb[0].mxu0
        %v1460 = vadd.f32 %v1391, %v1459
        %v1461 = vpop.f32.mrb[0].mxu0
        %1462 = vdwg.mxu0
        %s1463 = scalar_lea.vmem %s5, 64
        %v1464 = vld [vmem:[%s1463] sm:$0xff]
        %v1465 = vld [vmem:[%s1463 + $0x8] sm:$0xff]
        %v1466 = vld [vmem:[%s1463 + $0x10] sm:$0xff]
        %v1467 = vld [vmem:[%s1463 + $0x18] sm:$0xff]
        %s1468 = scalar_lea.vmem %s6, 2
        %v1469 = vld [vmem:[%s1468] sm:$0x1]
        %v1471 = vlaneseq
        %v1472 = vshrl.u32 %v1471, 7
        %v1473 = vsub.s32 0, %v1472
        %v1474 = vrot.slane %v1469, %v1473
        %1476 = vmatprep.subr.mxu0 0.0
        %1477 = vmatpush1.msra.mxu0 %v1464
        %1478 = vmatprep.subr.mxu0 0.0
        %1479 = vmatpush1.msra.mxu0 %v1465
        %1480 = vmatprep.subr.mxu0 0.0
        %1481 = vmatpush1.msra.mxu0 %v1466
        %1482 = vmatprep.subr.mxu0 0.0
        %1483 = vmatpush1.msra.mxu0 %v1467
        %1484 = vmatprep.subr.mxu0 0.0
        %1485 = vmatpush1.msra.mxu0 0.0
        %1486 = vmatprep.subr.mxu0 0.0
        %1487 = vmatpush1.msra.mxu0 0.0
        %1488 = vmatprep.subr.mxu0 0.0
        %1489 = vmatpush1.msra.mxu0 0.0
        %1490 = vmatprep.subr.mxu0 0.0
        %1491 = vmatpush1.msra.mxu0 0.0
        %1492 = vmatprep.subr.mxu0 0.0
        %1493 = vmatpush1.msra.mxu0 0.0
        %1494 = vmatprep.subr.mxu0 0.0
        %1495 = vmatpush1.msra.mxu0 0.0
        %1496 = vmatprep.subr.mxu0 0.0
        %1497 = vmatpush1.msra.mxu0 0.0
        %1498 = vmatprep.subr.mxu0 0.0
        %1499 = vmatpush1.msra.mxu0 0.0
        %1500 = vmatprep.subr.mxu0 0.0
        %1501 = vmatpush1.msra.mxu0 0.0
        %1502 = vmatprep.subr.mxu0 0.0
        %1503 = vmatpush1.msra.mxu0 0.0
        %1504 = vmatprep.subr.mxu0 0.0
        %1505 = vmatpush1.msra.mxu0 0.0
        %1506 = vmatprep.subr.mxu0 0.0
        %1507 = vmatpush1.msra.mxu0 0.0
        %1508 = vmatprep.subr.mxu0 0.0
        %1509 = vmatpush1.msra.mxu0 0.0
        %1510 = vmatprep.subr.mxu0 0.0
        %1511 = vmatpush1.msra.mxu0 0.0
        %1512 = vmatprep.subr.mxu0 0.0
        %1513 = vmatpush1.msra.mxu0 0.0
        %1514 = vmatprep.subr.mxu0 0.0
        %1515 = vmatpush1.msra.mxu0 0.0
        %1516 = vmatprep.subr.mxu0 0.0
        %1517 = vmatpush1.msra.mxu0 0.0
        %1518 = vmatprep.subr.mxu0 0.0
        %1519 = vmatpush1.msra.mxu0 0.0
        %1520 = vmatprep.subr.mxu0 0.0
        %1521 = vmatpush1.msra.mxu0 0.0
        %1522 = vmatprep.subr.mxu0 0.0
        %1523 = vmatpush1.msra.mxu0 0.0
        %1524 = vmatprep.subr.mxu0 0.0
        %1525 = vmatpush1.msra.mxu0 0.0
        %1526 = vmatprep.subr.mxu0 0.0
        %1527 = vmatpush1.msra.mxu0 0.0
        %1528 = vmatprep.subr.mxu0 0.0
        %1529 = vmatpush1.msra.mxu0 0.0
        %1530 = vmatprep.subr.mxu0 0.0
        %1531 = vmatpush1.msra.mxu0 0.0
        %1532 = vmatprep.subr.mxu0 0.0
        %1533 = vmatpush1.msra.mxu0 0.0
        %1534 = vmatprep.subr.mxu0 0.0
        %1535 = vmatpush1.msra.mxu0 0.0
        %1536 = vmatprep.subr.mxu0 0.0
        %1537 = vmatpush1.msra.mxu0 0.0
        %1538 = vmatprep.subr.mxu0 0.0
        %1539 = vmatpush1.msra.mxu0 0.0
        %1540 = vmatprep.mubr.f32.mxu0 0.0
        %1541 = vmatmul.mubr.f32.gmra.mrb[0].mxu0 %v342
        %v1542 = vpop.f32.mrb[0].mxu0
        %v1543 = vadd.f32 %v1474, %v1542
        %v1544 = vpop.f32.mrb[0].mxu0
        %1545 = vdwg.mxu0
        %v1547 = vsel %vm576, %v1377, 0
        %v1550 = vsel %vm576, %v1460, 0
        %1552 = vmatprep.subr.mxu0 0.0
        %1553 = vmatpush1.xpose.msra.mxu0 %v1550
        %1554 = vmatprep.subr.mxu0 0.0
        %1555 = vmatpush1.xpose.msra.mxu0 0.0
        %1556 = vmatprep.subr.mxu0 0.0
        %1557 = vmatpush1.xpose.msra.mxu0 0.0
        %1558 = vmatprep.subr.mxu0 0.0
        %1559 = vmatpush1.xpose.msra.mxu0 0.0
        %1560 = vmatprep.subr.mxu0 0.0
        %1561 = vmatpush1.xpose.msra.mxu0 0.0
        %1562 = vmatprep.subr.mxu0 0.0
        %1563 = vmatpush1.xpose.msra.mxu0 0.0
        %1564 = vmatprep.subr.mxu0 0.0
        %1565 = vmatpush1.xpose.msra.mxu0 0.0
        %1566 = vmatprep.subr.mxu0 0.0
        %1567 = vmatpush1.xpose.msra.mxu0 0.0
        %1568 = vmatprep.subr.mxu0 0.0
        %1569 = vmatpush1.xpose.msra.mxu0 0.0
        %1570 = vmatprep.subr.mxu0 0.0
        %1571 = vmatpush1.xpose.msra.mxu0 0.0
        %1572 = vmatprep.subr.mxu0 0.0
        %1573 = vmatpush1.xpose.msra.mxu0 0.0
        %1574 = vmatprep.subr.mxu0 0.0
        %1575 = vmatpush1.xpose.msra.mxu0 0.0
        %1576 = vmatprep.subr.mxu0 0.0
        %1577 = vmatpush1.xpose.msra.mxu0 0.0
        %1578 = vmatprep.subr.mxu0 0.0
        %1579 = vmatpush1.xpose.msra.mxu0 0.0
        %1580 = vmatprep.subr.mxu0 0.0
        %1581 = vmatpush1.xpose.msra.mxu0 0.0
        %1582 = vmatprep.subr.mxu0 0.0
        %1583 = vmatpush1.xpose.msra.mxu0 0.0
        %1584 = vmatprep.subr.mxu0 0.0
        %1585 = vmatpush1.xpose.msra.mxu0 0.0
        %1586 = vmatprep.subr.mxu0 0.0
        %1587 = vmatpush1.xpose.msra.mxu0 0.0
        %1588 = vmatprep.subr.mxu0 0.0
        %1589 = vmatpush1.xpose.msra.mxu0 0.0
        %1590 = vmatprep.subr.mxu0 0.0
        %1591 = vmatpush1.xpose.msra.mxu0 0.0
        %1592 = vmatprep.subr.mxu0 0.0
        %1593 = vmatpush1.xpose.msra.mxu0 0.0
        %1594 = vmatprep.subr.mxu0 0.0
        %1595 = vmatpush1.xpose.msra.mxu0 0.0
        %1596 = vmatprep.subr.mxu0 0.0
        %1597 = vmatpush1.xpose.msra.mxu0 0.0
        %1598 = vmatprep.subr.mxu0 0.0
        %1599 = vmatpush1.xpose.msra.mxu0 0.0
        %1600 = vmatprep.subr.mxu0 0.0
        %1601 = vmatpush1.xpose.msra.mxu0 0.0
        %1602 = vmatprep.subr.mxu0 0.0
        %1603 = vmatpush1.xpose.msra.mxu0 0.0
        %1604 = vmatprep.subr.mxu0 0.0
        %1605 = vmatpush1.xpose.msra.mxu0 0.0
        %1606 = vmatprep.subr.mxu0 0.0
        %1607 = vmatpush1.xpose.msra.mxu0 0.0
        %1608 = vmatprep.subr.mxu0 0.0
        %1609 = vmatpush1.xpose.msra.mxu0 0.0
        %1610 = vmatprep.subr.mxu0 0.0
        %1611 = vmatpush1.xpose.msra.mxu0 0.0
        %1612 = vmatprep.subr.mxu0 0.0
        %1613 = vmatpush1.xpose.msra.mxu0 0.0
        %1614 = vmatprep.subr.mxu0 0.0
        %1615 = vmatpush1.xpose.msra.mxu0 0.0
        %1616 = vmatprep.mubr.f32.mxu0 0.0
        %1617 = vmatmul.mubr.f32.gmra.mrb[0].mxu0 %v1547
        %v1618 = vpop.f32.mrb[0].mxu0
        %v1619 = vadd.f32 0.0, %v1618
        %v1620 = vpop.f32.mrb[0].mxu0
        %1621 = vdwg.mxu0
        %v1622 = vmul.f32 %v1619, 0.35355338
        %v1623 = vsel %vm576, %v1622, -inf
        %1624 = vmax.xlane.f32.xlu0 %v1623
        %v1625 = vpop.xlane.xlu0 %1624
        %v1626 = vsub.f32 %v1622, %v1625
        %v1627 = vmul.f32 %v1626, 1.442695
        %v1628 = vpow.pop %v1627
        %v1629 = vsel %vm576, %v1628, 0.0
        %1630 = vadd.xlane.f32.xlu0 %v1629
        %v1631 = vpop.xlane.xlu0 %1630
        %v1632 = vrcp.pop %v1631
        %v1633 = vmul.f32 %v1628, %v1632
        %v1635 = vsel %vm576, %v1633, 0
        %1637 = vmatprep.subr.mxu0 0.0
        %1638 = vmatpush1.msra.mxu0 %v1543
        %1639 = vmatprep.subr.mxu0 0.0
        %1640 = vmatpush1.msra.mxu0 0.0
        %1641 = vmatprep.subr.mxu0 0.0
        %1642 = vmatpush1.msra.mxu0 0.0
        %1643 = vmatprep.subr.mxu0 0.0
        %1644 = vmatpush1.msra.mxu0 0.0
        %1645 = vmatprep.subr.mxu0 0.0
        %1646 = vmatpush1.msra.mxu0 0.0
        %1647 = vmatprep.subr.mxu0 0.0
        %1648 = vmatpush1.msra.mxu0 0.0
        %1649 = vmatprep.subr.mxu0 0.0
        %1650 = vmatpush1.msra.mxu0 0.0
        %1651 = vmatprep.subr.mxu0 0.0
        %1652 = vmatpush1.msra.mxu0 0.0
        %1653 = vmatprep.subr.mxu0 0.0
        %1654 = vmatpush1.msra.mxu0 0.0
        %1655 = vmatprep.subr.mxu0 0.0
        %1656 = vmatpush1.msra.mxu0 0.0
        %1657 = vmatprep.subr.mxu0 0.0
        %1658 = vmatpush1.msra.mxu0 0.0
        %1659 = vmatprep.subr.mxu0 0.0
        %1660 = vmatpush1.msra.mxu0 0.0
        %1661 = vmatprep.subr.mxu0 0.0
        %1662 = vmatpush1.msra.mxu0 0.0
        %1663 = vmatprep.subr.mxu0 0.0
        %1664 = vmatpush1.msra.mxu0 0.0
        %1665 = vmatprep.subr.mxu0 0.0
        %1666 = vmatpush1.msra.mxu0 0.0
        %1667 = vmatprep.subr.mxu0 0.0
        %1668 = vmatpush1.msra.mxu0 0.0
        %1669 = vmatprep.subr.mxu0 0.0
        %1670 = vmatpush1.msra.mxu0 0.0
        %1671 = vmatprep.subr.mxu0 0.0
        %1672 = vmatpush1.msra.mxu0 0.0
        %1673 = vmatprep.subr.mxu0 0.0
        %1674 = vmatpush1.msra.mxu0 0.0
        %1675 = vmatprep.subr.mxu0 0.0
        %1676 = vmatpush1.msra.mxu0 0.0
        %1677 = vmatprep.subr.mxu0 0.0
        %1678 = vmatpush1.msra.mxu0 0.0
        %1679 = vmatprep.subr.mxu0 0.0
        %1680 = vmatpush1.msra.mxu0 0.0
        %1681 = vmatprep.subr.mxu0 0.0
        %1682 = vmatpush1.msra.mxu0 0.0
        %1683 = vmatprep.subr.mxu0 0.0
        %1684 = vmatpush1.msra.mxu0 0.0
        %1685 = vmatprep.subr.mxu0 0.0
        %1686 = vmatpush1.msra.mxu0 0.0
        %1687 = vmatprep.subr.mxu0 0.0
        %1688 = vmatpush1.msra.mxu0 0.0
        %1689 = vmatprep.subr.mxu0 0.0
        %1690 = vmatpush1.msra.mxu0 0.0
        %1691 = vmatprep.subr.mxu0 0.0
        %1692 = vmatpush1.msra.mxu0 0.0
        %1693 = vmatprep.subr.mxu0 0.0
        %1694 = vmatpush1.msra.mxu0 0.0
        %1695 = vmatprep.subr.mxu0 0.0
        %1696 = vmatpush1.msra.mxu0 0.0
        %1697 = vmatprep.subr.mxu0 0.0
        %1698 = vmatpush1.msra.mxu0 0.0
        %1699 = vmatprep.subr.mxu0 0.0
        %1700 = vmatpush1.msra.mxu0 0.0
        %1701 = vmatprep.mubr.f32.mxu0 0.0
        %1702 = vmatmul.mubr.f32.gmra.mrb[0].mxu0 %v1635
        %v1703 = vpop.f32.mrb[0].mxu0
        %v1704 = vadd.f32 0.0, %v1703
        %v1705 = vpop.f32.mrb[0].mxu0
        %1706 = vdwg.mxu0
        %s1707 = scalar_lea.vmem %s7, 16
        %v1708 = vld [vmem:[%s1707] sm:$0xff]
        %v1710 = vsel %vm576, %v1704, 0
        %1712 = vmatprep.subr.mxu0 0.0
        %1713 = vmatpush1.msra.mxu0 %v1708
        %1714 = vmatprep.subr.mxu0 0.0
        %1715 = vmatpush1.msra.mxu0 0.0
        %1716 = vmatprep.subr.mxu0 0.0
        %1717 = vmatpush1.msra.mxu0 0.0
        %1718 = vmatprep.subr.mxu0 0.0
        %1719 = vmatpush1.msra.mxu0 0.0
        %1720 = vmatprep.subr.mxu0 0.0
        %1721 = vmatpush1.msra.mxu0 0.0
        %1722 = vmatprep.subr.mxu0 0.0
        %1723 = vmatpush1.msra.mxu0 0.0
        %1724 = vmatprep.subr.mxu0 0.0
        %1725 = vmatpush1.msra.mxu0 0.0
        %1726 = vmatprep.subr.mxu0 0.0
        %1727 = vmatpush1.msra.mxu0 0.0
        %1728 = vmatprep.subr.mxu0 0.0
        %1729 = vmatpush1.msra.mxu0 0.0
        %1730 = vmatprep.subr.mxu0 0.0
        %1731 = vmatpush1.msra.mxu0 0.0
        %1732 = vmatprep.subr.mxu0 0.0
        %1733 = vmatpush1.msra.mxu0 0.0
        %1734 = vmatprep.subr.mxu0 0.0
        %1735 = vmatpush1.msra.mxu0 0.0
        %1736 = vmatprep.subr.mxu0 0.0
        %1737 = vmatpush1.msra.mxu0 0.0
        %1738 = vmatprep.subr.mxu0 0.0
        %1739 = vmatpush1.msra.mxu0 0.0
        %1740 = vmatprep.subr.mxu0 0.0
        %1741 = vmatpush1.msra.mxu0 0.0
        %1742 = vmatprep.subr.mxu0 0.0
        %1743 = vmatpush1.msra.mxu0 0.0
        %1744 = vmatprep.subr.mxu0 0.0
        %1745 = vmatpush1.msra.mxu0 0.0
        %1746 = vmatprep.subr.mxu0 0.0
        %1747 = vmatpush1.msra.mxu0 0.0
        %1748 = vmatprep.subr.mxu0 0.0
        %1749 = vmatpush1.msra.mxu0 0.0
        %1750 = vmatprep.subr.mxu0 0.0
        %1751 = vmatpush1.msra.mxu0 0.0
        %1752 = vmatprep.subr.mxu0 0.0
        %1753 = vmatpush1.msra.mxu0 0.0
        %1754 = vmatprep.subr.mxu0 0.0
        %1755 = vmatpush1.msra.mxu0 0.0
        %1756 = vmatprep.subr.mxu0 0.0
        %1757 = vmatpush1.msra.mxu0 0.0
        %1758 = vmatprep.subr.mxu0 0.0
        %1759 = vmatpush1.msra.mxu0 0.0
        %1760 = vmatprep.subr.mxu0 0.0
        %1761 = vmatpush1.msra.mxu0 0.0
        %1762 = vmatprep.subr.mxu0 0.0
        %1763 = vmatpush1.msra.mxu0 0.0
        %1764 = vmatprep.subr.mxu0 0.0
        %1765 = vmatpush1.msra.mxu0 0.0
        %1766 = vmatprep.subr.mxu0 0.0
        %1767 = vmatpush1.msra.mxu0 0.0
        %1768 = vmatprep.subr.mxu0 0.0
        %1769 = vmatpush1.msra.mxu0 0.0
        %1770 = vmatprep.subr.mxu0 0.0
        %1771 = vmatpush1.msra.mxu0 0.0
        %1772 = vmatprep.subr.mxu0 0.0
        %1773 = vmatpush1.msra.mxu0 0.0
        %1774 = vmatprep.subr.mxu0 0.0
        %1775 = vmatpush1.msra.mxu0 0.0
        %1776 = vmatprep.mubr.f32.mxu0 0.0
        %1777 = vmatmul.mubr.f32.gmra.mrb[0].mxu0 %v1710
        %v1778 = vpop.f32.mrb[0].mxu0
        %v1779 = vadd.f32 0.0, %v1778
        %v1780 = vpop.f32.mrb[0].mxu0
        %1781 = vdwg.mxu0
        %v1782 = vadd.f32 %v1294, %v1779
        %s1783 = scalar_lea.vmem %s1, 96
        %v1784 = vld [vmem:[%s1783] sm:$0xff]
        %v1785 = vld [vmem:[%s1783 + $0x8] sm:$0xff]
        %v1786 = vld [vmem:[%s1783 + $0x10] sm:$0xff]
        %v1787 = vld [vmem:[%s1783 + $0x18] sm:$0xff]
        %s1788 = scalar_lea.vmem %s2, 3
        %v1789 = vld [vmem:[%s1788] sm:$0x1]
        %v1791 = vlaneseq
        %v1792 = vshrl.u32 %v1791, 7
        %v1793 = vsub.s32 0, %v1792
        %v1794 = vrot.slane %v1789, %v1793
        %1796 = vmatprep.subr.mxu0 0.0
        %1797 = vmatpush1.msra.mxu0 %v1784
        %1798 = vmatprep.subr.mxu0 0.0
        %1799 = vmatpush1.msra.mxu0 %v1785
        %1800 = vmatprep.subr.mxu0 0.0
        %1801 = vmatpush1.msra.mxu0 %v1786
        %1802 = vmatprep.subr.mxu0 0.0
        %1803 = vmatpush1.msra.mxu0 %v1787
        %1804 = vmatprep.subr.mxu0 0.0
        %1805 = vmatpush1.msra.mxu0 0.0
        %1806 = vmatprep.subr.mxu0 0.0
        %1807 = vmatpush1.msra.mxu0 0.0
        %1808 = vmatprep.subr.mxu0 0.0
        %1809 = vmatpush1.msra.mxu0 0.0
        %1810 = vmatprep.subr.mxu0 0.0
        %1811 = vmatpush1.msra.mxu0 0.0
        %1812 = vmatprep.subr.mxu0 0.0
        %1813 = vmatpush1.msra.mxu0 0.0
        %1814 = vmatprep.subr.mxu0 0.0
        %1815 = vmatpush1.msra.mxu0 0.0
        %1816 = vmatprep.subr.mxu0 0.0
        %1817 = vmatpush1.msra.mxu0 0.0
        %1818 = vmatprep.subr.mxu0 0.0
        %1819 = vmatpush1.msra.mxu0 0.0
        %1820 = vmatprep.subr.mxu0 0.0
        %1821 = vmatpush1.msra.mxu0 0.0
        %1822 = vmatprep.subr.mxu0 0.0
        %1823 = vmatpush1.msra.mxu0 0.0
        %1824 = vmatprep.subr.mxu0 0.0
        %1825 = vmatpush1.msra.mxu0 0.0
        %1826 = vmatprep.subr.mxu0 0.0
        %1827 = vmatpush1.msra.mxu0 0.0
        %1828 = vmatprep.subr.mxu0 0.0
        %1829 = vmatpush1.msra.mxu0 0.0
        %1830 = vmatprep.subr.mxu0 0.0
        %1831 = vmatpush1.msra.mxu0 0.0
        %1832 = vmatprep.subr.mxu0 0.0
        %1833 = vmatpush1.msra.mxu0 0.0
        %1834 = vmatprep.subr.mxu0 0.0
        %1835 = vmatpush1.msra.mxu0 0.0
        %1836 = vmatprep.subr.mxu0 0.0
        %1837 = vmatpush1.msra.mxu0 0.0
        %1838 = vmatprep.subr.mxu0 0.0
        %1839 = vmatpush1.msra.mxu0 0.0
        %1840 = vmatprep.subr.mxu0 0.0
        %1841 = vmatpush1.msra.mxu0 0.0
        %1842 = vmatprep.subr.mxu0 0.0
        %1843 = vmatpush1.msra.mxu0 0.0
        %1844 = vmatprep.subr.mxu0 0.0
        %1845 = vmatpush1.msra.mxu0 0.0
        %1846 = vmatprep.subr.mxu0 0.0
        %1847 = vmatpush1.msra.mxu0 0.0
        %1848 = vmatprep.subr.mxu0 0.0
        %1849 = vmatpush1.msra.mxu0 0.0
        %1850 = vmatprep.subr.mxu0 0.0
        %1851 = vmatpush1.msra.mxu0 0.0
        %1852 = vmatprep.subr.mxu0 0.0
        %1853 = vmatpush1.msra.mxu0 0.0
        %1854 = vmatprep.subr.mxu0 0.0
        %1855 = vmatpush1.msra.mxu0 0.0
        %1856 = vmatprep.subr.mxu0 0.0
        %1857 = vmatpush1.msra.mxu0 0.0
        %1858 = vmatprep.subr.mxu0 0.0
        %1859 = vmatpush1.msra.mxu0 0.0
        %1860 = vmatprep.mubr.f32.mxu0 0.0
        %1861 = vmatmul.mubr.f32.gmra.mrb[0].mxu0 %v342
        %v1862 = vpop.f32.mrb[0].mxu0
        %v1863 = vadd.f32 %v1794, %v1862
        %v1864 = vpop.f32.mrb[0].mxu0
        %1865 = vdwg.mxu0
        %s1866 = scalar_lea.vmem %s3, 96
        %v1867 = vld [vmem:[%s1866] sm:$0xff]
        %v1868 = vld [vmem:[%s1866 + $0x8] sm:$0xff]
        %v1869 = vld [vmem:[%s1866 + $0x10] sm:$0xff]
        %v1870 = vld [vmem:[%s1866 + $0x18] sm:$0xff]
        %s1871 = scalar_lea.vmem %s4, 3
        %v1872 = vld [vmem:[%s1871] sm:$0x1]
        %v1874 = vlaneseq
        %v1875 = vshrl.u32 %v1874, 7
        %v1876 = vsub.s32 0, %v1875
        %v1877 = vrot.slane %v1872, %v1876
        %1879 = vmatprep.subr.mxu0 0.0
        %1880 = vmatpush1.msra.mxu0 %v1867
        %1881 = vmatprep.subr.mxu0 0.0
        %1882 = vmatpush1.msra.mxu0 %v1868
        %1883 = vmatprep.subr.mxu0 0.0
        %1884 = vmatpush1.msra.mxu0 %v1869
        %1885 = vmatprep.subr.mxu0 0.0
        %1886 = vmatpush1.msra.mxu0 %v1870
        %1887 = vmatprep.subr.mxu0 0.0
        %1888 = vmatpush1.msra.mxu0 0.0
        %1889 = vmatprep.subr.mxu0 0.0
        %1890 = vmatpush1.msra.mxu0 0.0
        %1891 = vmatprep.subr.mxu0 0.0
        %1892 = vmatpush1.msra.mxu0 0.0
        %1893 = vmatprep.subr.mxu0 0.0
        %1894 = vmatpush1.msra.mxu0 0.0
        %1895 = vmatprep.subr.mxu0 0.0
        %1896 = vmatpush1.msra.mxu0 0.0
        %1897 = vmatprep.subr.mxu0 0.0
        %1898 = vmatpush1.msra.mxu0 0.0
        %1899 = vmatprep.subr.mxu0 0.0
        %1900 = vmatpush1.msra.mxu0 0.0
        %1901 = vmatprep.subr.mxu0 0.0
        %1902 = vmatpush1.msra.mxu0 0.0
        %1903 = vmatprep.subr.mxu0 0.0
        %1904 = vmatpush1.msra.mxu0 0.0
        %1905 = vmatprep.subr.mxu0 0.0
        %1906 = vmatpush1.msra.mxu0 0.0
        %1907 = vmatprep.subr.mxu0 0.0
        %1908 = vmatpush1.msra.mxu0 0.0
        %1909 = vmatprep.subr.mxu0 0.0
        %1910 = vmatpush1.msra.mxu0 0.0
        %1911 = vmatprep.subr.mxu0 0.0
        %1912 = vmatpush1.msra.mxu0 0.0
        %1913 = vmatprep.subr.mxu0 0.0
        %1914 = vmatpush1.msra.mxu0 0.0
        %1915 = vmatprep.subr.mxu0 0.0
        %1916 = vmatpush1.msra.mxu0 0.0
        %1917 = vmatprep.subr.mxu0 0.0
        %1918 = vmatpush1.msra.mxu0 0.0
        %1919 = vmatprep.subr.mxu0 0.0
        %1920 = vmatpush1.msra.mxu0 0.0
        %1921 = vmatprep.subr.mxu0 0.0
        %1922 = vmatpush1.msra.mxu0 0.0
        %1923 = vmatprep.subr.mxu0 0.0
        %1924 = vmatpush1.msra.mxu0 0.0
        %1925 = vmatprep.subr.mxu0 0.0
        %1926 = vmatpush1.msra.mxu0 0.0
        %1927 = vmatprep.subr.mxu0 0.0
        %1928 = vmatpush1.msra.mxu0 0.0
        %1929 = vmatprep.subr.mxu0 0.0
        %1930 = vmatpush1.msra.mxu0 0.0
        %1931 = vmatprep.subr.mxu0 0.0
        %1932 = vmatpush1.msra.mxu0 0.0
        %1933 = vmatprep.subr.mxu0 0.0
        %1934 = vmatpush1.msra.mxu0 0.0
        %1935 = vmatprep.subr.mxu0 0.0
        %1936 = vmatpush1.msra.mxu0 0.0
        %1937 = vmatprep.subr.mxu0 0.0
        %1938 = vmatpush1.msra.mxu0 0.0
        %1939 = vmatprep.subr.mxu0 0.0
        %1940 = vmatpush1.msra.mxu0 0.0
        %1941 = vmatprep.subr.mxu0 0.0
        %1942 = vmatpush1.msra.mxu0 0.0
        %1943 = vmatprep.mubr.f32.mxu0 0.0
        %1944 = vmatmul.mubr.f32.gmra.mrb[0].mxu0 %v342
        %v1945 = vpop.f32.mrb[0].mxu0
        %v1946 = vadd.f32 %v1877, %v1945
        %v1947 = vpop.f32.mrb[0].mxu0
        %1948 = vdwg.mxu0
        %s1949 = scalar_lea.vmem %s5, 96
        %v1950 = vld [vmem:[%s1949] sm:$0xff]
        %v1951 = vld [vmem:[%s1949 + $0x8] sm:$0xff]
        %v1952 = vld [vmem:[%s1949 + $0x10] sm:$0xff]
        %v1953 = vld [vmem:[%s1949 + $0x18] sm:$0xff]
        %s1954 = scalar_lea.vmem %s6, 3
        %v1955 = vld [vmem:[%s1954] sm:$0x1]
        %v1957 = vlaneseq
        %v1958 = vshrl.u32 %v1957, 7
        %v1959 = vsub.s32 0, %v1958
        %v1960 = vrot.slane %v1955, %v1959
        %1962 = vmatprep.subr.mxu0 0.0
        %1963 = vmatpush1.msra.mxu0 %v1950
        %1964 = vmatprep.subr.mxu0 0.0
        %1965 = vmatpush1.msra.mxu0 %v1951
        %1966 = vmatprep.subr.mxu0 0.0
        %1967 = vmatpush1.msra.mxu0 %v1952
        %1968 = vmatprep.subr.mxu0 0.0
        %1969 = vmatpush1.msra.mxu0 %v1953
        %1970 = vmatprep.subr.mxu0 0.0
        %1971 = vmatpush1.msra.mxu0 0.0
        %1972 = vmatprep.subr.mxu0 0.0
        %1973 = vmatpush1.msra.mxu0 0.0
        %1974 = vmatprep.subr.mxu0 0.0
        %1975 = vmatpush1.msra.mxu0 0.0
        %1976 = vmatprep.subr.mxu0 0.0
        %1977 = vmatpush1.msra.mxu0 0.0
        %1978 = vmatprep.subr.mxu0 0.0
        %1979 = vmatpush1.msra.mxu0 0.0
        %1980 = vmatprep.subr.mxu0 0.0
        %1981 = vmatpush1.msra.mxu0 0.0
        %1982 = vmatprep.subr.mxu0 0.0
        %1983 = vmatpush1.msra.mxu0 0.0
        %1984 = vmatprep.subr.mxu0 0.0
        %1985 = vmatpush1.msra.mxu0 0.0
        %1986 = vmatprep.subr.mxu0 0.0
        %1987 = vmatpush1.msra.mxu0 0.0
        %1988 = vmatprep.subr.mxu0 0.0
        %1989 = vmatpush1.msra.mxu0 0.0
        %1990 = vmatprep.subr.mxu0 0.0
        %1991 = vmatpush1.msra.mxu0 0.0
        %1992 = vmatprep.subr.mxu0 0.0
        %1993 = vmatpush1.msra.mxu0 0.0
        %1994 = vmatprep.subr.mxu0 0.0
        %1995 = vmatpush1.msra.mxu0 0.0
        %1996 = vmatprep.subr.mxu0 0.0
        %1997 = vmatpush1.msra.mxu0 0.0
        %1998 = vmatprep.subr.mxu0 0.0
        %1999 = vmatpush1.msra.mxu0 0.0
        %2000 = vmatprep.subr.mxu0 0.0
        %2001 = vmatpush1.msra.mxu0 0.0
        %2002 = vmatprep.subr.mxu0 0.0
        %2003 = vmatpush1.msra.mxu0 0.0
        %2004 = vmatprep.subr.mxu0 0.0
        %2005 = vmatpush1.msra.mxu0 0.0
        %2006 = vmatprep.subr.mxu0 0.0
        %2007 = vmatpush1.msra.mxu0 0.0
        %2008 = vmatprep.subr.mxu0 0.0
        %2009 = vmatpush1.msra.mxu0 0.0
        %2010 = vmatprep.subr.mxu0 0.0
        %2011 = vmatpush1.msra.mxu0 0.0
        %2012 = vmatprep.subr.mxu0 0.0
        %2013 = vmatpush1.msra.mxu0 0.0
        %2014 = vmatprep.subr.mxu0 0.0
        %2015 = vmatpush1.msra.mxu0 0.0
        %2016 = vmatprep.subr.mxu0 0.0
        %2017 = vmatpush1.msra.mxu0 0.0
        %2018 = vmatprep.subr.mxu0 0.0
        %2019 = vmatpush1.msra.mxu0 0.0
        %2020 = vmatprep.subr.mxu0 0.0
        %2021 = vmatpush1.msra.mxu0 0.0
        %2022 = vmatprep.subr.mxu0 0.0
        %2023 = vmatpush1.msra.mxu0 0.0
        %2024 = vmatprep.subr.mxu0 0.0
        %2025 = vmatpush1.msra.mxu0 0.0
        %2026 = vmatprep.mubr.f32.mxu0 0.0
        %2027 = vmatmul.mubr.f32.gmra.mrb[0].mxu0 %v342
        %v2028 = vpop.f32.mrb[0].mxu0
        %v2029 = vadd.f32 %v1960, %v2028
        %v2030 = vpop.f32.mrb[0].mxu0
        %2031 = vdwg.mxu0
        %v2033 = vsel %vm576, %v1863, 0
        %v2036 = vsel %vm576, %v1946, 0
        %2038 = vmatprep.subr.mxu0 0.0
        %2039 = vmatpush1.xpose.msra.mxu0 %v2036
        %2040 = vmatprep.subr.mxu0 0.0
        %2041 = vmatpush1.xpose.msra.mxu0 0.0
        %2042 = vmatprep.subr.mxu0 0.0
        %2043 = vmatpush1.xpose.msra.mxu0 0.0
        %2044 = vmatprep.subr.mxu0 0.0
        %2045 = vmatpush1.xpose.msra.mxu0 0.0
        %2046 = vmatprep.subr.mxu0 0.0
        %2047 = vmatpush1.xpose.msra.mxu0 0.0
        %2048 = vmatprep.subr.mxu0 0.0
        %2049 = vmatpush1.xpose.msra.mxu0 0.0
        %2050 = vmatprep.subr.mxu0 0.0
        %2051 = vmatpush1.xpose.msra.mxu0 0.0
        %2052 = vmatprep.subr.mxu0 0.0
        %2053 = vmatpush1.xpose.msra.mxu0 0.0
        %2054 = vmatprep.subr.mxu0 0.0
        %2055 = vmatpush1.xpose.msra.mxu0 0.0
        %2056 = vmatprep.subr.mxu0 0.0
        %2057 = vmatpush1.xpose.msra.mxu0 0.0
        %2058 = vmatprep.subr.mxu0 0.0
        %2059 = vmatpush1.xpose.msra.mxu0 0.0
        %2060 = vmatprep.subr.mxu0 0.0
        %2061 = vmatpush1.xpose.msra.mxu0 0.0
        %2062 = vmatprep.subr.mxu0 0.0
        %2063 = vmatpush1.xpose.msra.mxu0 0.0
        %2064 = vmatprep.subr.mxu0 0.0
        %2065 = vmatpush1.xpose.msra.mxu0 0.0
        %2066 = vmatprep.subr.mxu0 0.0
        %2067 = vmatpush1.xpose.msra.mxu0 0.0
        %2068 = vmatprep.subr.mxu0 0.0
        %2069 = vmatpush1.xpose.msra.mxu0 0.0
        %2070 = vmatprep.subr.mxu0 0.0
        %2071 = vmatpush1.xpose.msra.mxu0 0.0
        %2072 = vmatprep.subr.mxu0 0.0
        %2073 = vmatpush1.xpose.msra.mxu0 0.0
        %2074 = vmatprep.subr.mxu0 0.0
        %2075 = vmatpush1.xpose.msra.mxu0 0.0
        %2076 = vmatprep.subr.mxu0 0.0
        %2077 = vmatpush1.xpose.msra.mxu0 0.0
        %2078 = vmatprep.subr.mxu0 0.0
        %2079 = vmatpush1.xpose.msra.mxu0 0.0
        %2080 = vmatprep.subr.mxu0 0.0
        %2081 = vmatpush1.xpose.msra.mxu0 0.0
        %2082 = vmatprep.subr.mxu0 0.0
        %2083 = vmatpush1.xpose.msra.mxu0 0.0
        %2084 = vmatprep.subr.mxu0 0.0
        %2085 = vmatpush1.xpose.msra.mxu0 0.0
        %2086 = vmatprep.subr.mxu0 0.0
        %2087 = vmatpush1.xpose.msra.mxu0 0.0
        %2088 = vmatprep.subr.mxu0 0.0
        %2089 = vmatpush1.xpose.msra.mxu0 0.0
        %2090 = vmatprep.subr.mxu0 0.0
        %2091 = vmatpush1.xpose.msra.mxu0 0.0
        %2092 = vmatprep.subr.mxu0 0.0
        %2093 = vmatpush1.xpose.msra.mxu0 0.0
        %2094 = vmatprep.subr.mxu0 0.0
        %2095 = vmatpush1.xpose.msra.mxu0 0.0
        %2096 = vmatprep.subr.mxu0 0.0
        %2097 = vmatpush1.xpose.msra.mxu0 0.0
        %2098 = vmatprep.subr.mxu0 0.0
        %2099 = vmatpush1.xpose.msra.mxu0 0.0
        %2100 = vmatprep.subr.mxu0 0.0
        %2101 = vmatpush1.xpose.msra.mxu0 0.0
        %2102 = vmatprep.mubr.f32.mxu0 0.0
        %2103 = vmatmul.mubr.f32.gmra.mrb[0].mxu0 %v2033
        %v2104 = vpop.f32.mrb[0].mxu0
        %v2105 = vadd.f32 0.0, %v2104
        %v2106 = vpop.f32.mrb[0].mxu0
        %2107 = vdwg.mxu0
        %v2108 = vmul.f32 %v2105, 0.35355338
        %v2109 = vsel %vm576, %v2108, -inf
        %2110 = vmax.xlane.f32.xlu0 %v2109
        %v2111 = vpop.xlane.xlu0 %2110
        %v2112 = vsub.f32 %v2108, %v2111
        %v2113 = vmul.f32 %v2112, 1.442695
        %v2114 = vpow.pop %v2113
        %v2115 = vsel %vm576, %v2114, 0.0
        %2116 = vadd.xlane.f32.xlu0 %v2115
        %v2117 = vpop.xlane.xlu0 %2116
        %v2118 = vrcp.pop %v2117
        %v2119 = vmul.f32 %v2114, %v2118
        %v2121 = vsel %vm576, %v2119, 0
        %2123 = vmatprep.subr.mxu0 0.0
        %2124 = vmatpush1.msra.mxu0 %v2029
        %2125 = vmatprep.subr.mxu0 0.0
        %2126 = vmatpush1.msra.mxu0 0.0
        %2127 = vmatprep.subr.mxu0 0.0
        %2128 = vmatpush1.msra.mxu0 0.0
        %2129 = vmatprep.subr.mxu0 0.0
        %2130 = vmatpush1.msra.mxu0 0.0
        %2131 = vmatprep.subr.mxu0 0.0
        %2132 = vmatpush1.msra.mxu0 0.0
        %2133 = vmatprep.subr.mxu0 0.0
        %2134 = vmatpush1.msra.mxu0 0.0
        %2135 = vmatprep.subr.mxu0 0.0
        %2136 = vmatpush1.msra.mxu0 0.0
        %2137 = vmatprep.subr.mxu0 0.0
        %2138 = vmatpush1.msra.mxu0 0.0
        %2139 = vmatprep.subr.mxu0 0.0
        %2140 = vmatpush1.msra.mxu0 0.0
        %2141 = vmatprep.subr.mxu0 0.0
        %2142 = vmatpush1.msra.mxu0 0.0
        %2143 = vmatprep.subr.mxu0 0.0
        %2144 = vmatpush1.msra.mxu0 0.0
        %2145 = vmatprep.subr.mxu0 0.0
        %2146 = vmatpush1.msra.mxu0 0.0
        %2147 = vmatprep.subr.mxu0 0.0
        %2148 = vmatpush1.msra.mxu0 0.0
        %2149 = vmatprep.subr.mxu0 0.0
        %2150 = vmatpush1.msra.mxu0 0.0
        %2151 = vmatprep.subr.mxu0 0.0
        %2152 = vmatpush1.msra.mxu0 0.0
        %2153 = vmatprep.subr.mxu0 0.0
        %2154 = vmatpush1.msra.mxu0 0.0
        %2155 = vmatprep.subr.mxu0 0.0
        %2156 = vmatpush1.msra.mxu0 0.0
        %2157 = vmatprep.subr.mxu0 0.0
        %2158 = vmatpush1.msra.mxu0 0.0
        %2159 = vmatprep.subr.mxu0 0.0
        %2160 = vmatpush1.msra.mxu0 0.0
        %2161 = vmatprep.subr.mxu0 0.0
        %2162 = vmatpush1.msra.mxu0 0.0
        %2163 = vmatprep.subr.mxu0 0.0
        %2164 = vmatpush1.msra.mxu0 0.0
        %2165 = vmatprep.subr.mxu0 0.0
        %2166 = vmatpush1.msra.mxu0 0.0
        %2167 = vmatprep.subr.mxu0 0.0
        %2168 = vmatpush1.msra.mxu0 0.0
        %2169 = vmatprep.subr.mxu0 0.0
        %2170 = vmatpush1.msra.mxu0 0.0
        %2171 = vmatprep.subr.mxu0 0.0
        %2172 = vmatpush1.msra.mxu0 0.0
        %2173 = vmatprep.subr.mxu0 0.0
        %2174 = vmatpush1.msra.mxu0 0.0
        %2175 = vmatprep.subr.mxu0 0.0
        %2176 = vmatpush1.msra.mxu0 0.0
        %2177 = vmatprep.subr.mxu0 0.0
        %2178 = vmatpush1.msra.mxu0 0.0
        %2179 = vmatprep.subr.mxu0 0.0
        %2180 = vmatpush1.msra.mxu0 0.0
        %2181 = vmatprep.subr.mxu0 0.0
        %2182 = vmatpush1.msra.mxu0 0.0
        %2183 = vmatprep.subr.mxu0 0.0
        %2184 = vmatpush1.msra.mxu0 0.0
        %2185 = vmatprep.subr.mxu0 0.0
        %2186 = vmatpush1.msra.mxu0 0.0
        %2187 = vmatprep.mubr.f32.mxu0 0.0
        %2188 = vmatmul.mubr.f32.gmra.mrb[0].mxu0 %v2121
        %v2189 = vpop.f32.mrb[0].mxu0
        %v2190 = vadd.f32 0.0, %v2189
        %v2191 = vpop.f32.mrb[0].mxu0
        %2192 = vdwg.mxu0
        %s2193 = scalar_lea.vmem %s7, 24
        %v2194 = vld [vmem:[%s2193] sm:$0xff]
        %v2196 = vsel %vm576, %v2190, 0
        %2198 = vmatprep.subr.mxu0 0.0
        %2199 = vmatpush1.msra.mxu0 %v2194
        %2200 = vmatprep.subr.mxu0 0.0
        %2201 = vmatpush1.msra.mxu0 0.0
        %2202 = vmatprep.subr.mxu0 0.0
        %2203 = vmatpush1.msra.mxu0 0.0
        %2204 = vmatprep.subr.mxu0 0.0
        %2205 = vmatpush1.msra.mxu0 0.0
        %2206 = vmatprep.subr.mxu0 0.0
        %2207 = vmatpush1.msra.mxu0 0.0
        %2208 = vmatprep.subr.mxu0 0.0
        %2209 = vmatpush1.msra.mxu0 0.0
        %2210 = vmatprep.subr.mxu0 0.0
        %2211 = vmatpush1.msra.mxu0 0.0
        %2212 = vmatprep.subr.mxu0 0.0
        %2213 = vmatpush1.msra.mxu0 0.0
        %2214 = vmatprep.subr.mxu0 0.0
        %2215 = vmatpush1.msra.mxu0 0.0
        %2216 = vmatprep.subr.mxu0 0.0
        %2217 = vmatpush1.msra.mxu0 0.0
        %2218 = vmatprep.subr.mxu0 0.0
        %2219 = vmatpush1.msra.mxu0 0.0
        %2220 = vmatprep.subr.mxu0 0.0
        %2221 = vmatpush1.msra.mxu0 0.0
        %2222 = vmatprep.subr.mxu0 0.0
        %2223 = vmatpush1.msra.mxu0 0.0
        %2224 = vmatprep.subr.mxu0 0.0
        %2225 = vmatpush1.msra.mxu0 0.0
        %2226 = vmatprep.subr.mxu0 0.0
        %2227 = vmatpush1.msra.mxu0 0.0
        %2228 = vmatprep.subr.mxu0 0.0
        %2229 = vmatpush1.msra.mxu0 0.0
        %2230 = vmatprep.subr.mxu0 0.0
        %2231 = vmatpush1.msra.mxu0 0.0
        %2232 = vmatprep.subr.mxu0 0.0
        %2233 = vmatpush1.msra.mxu0 0.0
        %2234 = vmatprep.subr.mxu0 0.0
        %2235 = vmatpush1.msra.mxu0 0.0
        %2236 = vmatprep.subr.mxu0 0.0
        %2237 = vmatpush1.msra.mxu0 0.0
        %2238 = vmatprep.subr.mxu0 0.0
        %2239 = vmatpush1.msra.mxu0 0.0
        %2240 = vmatprep.subr.mxu0 0.0
        %2241 = vmatpush1.msra.mxu0 0.0
        %2242 = vmatprep.subr.mxu0 0.0
        %2243 = vmatpush1.msra.mxu0 0.0
        %2244 = vmatprep.subr.mxu0 0.0
        %2245 = vmatpush1.msra.mxu0 0.0
        %2246 = vmatprep.subr.mxu0 0.0
        %2247 = vmatpush1.msra.mxu0 0.0
        %2248 = vmatprep.subr.mxu0 0.0
        %2249 = vmatpush1.msra.mxu0 0.0
        %2250 = vmatprep.subr.mxu0 0.0
        %2251 = vmatpush1.msra.mxu0 0.0
        %2252 = vmatprep.subr.mxu0 0.0
        %2253 = vmatpush1.msra.mxu0 0.0
        %2254 = vmatprep.subr.mxu0 0.0
        %2255 = vmatpush1.msra.mxu0 0.0
        %2256 = vmatprep.subr.mxu0 0.0
        %2257 = vmatpush1.msra.mxu0 0.0
        %2258 = vmatprep.subr.mxu0 0.0
        %2259 = vmatpush1.msra.mxu0 0.0
        %2260 = vmatprep.subr.mxu0 0.0
        %2261 = vmatpush1.msra.mxu0 0.0
        %2262 = vmatprep.mubr.f32.mxu0 0.0
        %2263 = vmatmul.mubr.f32.gmra.mrb[0].mxu0 %v2196
        %v2264 = vpop.f32.mrb[0].mxu0
        %v2265 = vadd.f32 0.0, %v2264
        %v2266 = vpop.f32.mrb[0].mxu0
        %2267 = vdwg.mxu0
        %v2268 = vadd.f32 %v1782, %v2265
        %v2269 = vld [vmem:[%s8] sm:$0x1]
        %v2271 = vlaneseq
        %v2272 = vshrl.u32 %v2271, 7
        %v2273 = vsub.s32 0, %v2272
        %v2274 = vrot.slane %v2269, %v2273
        %v2276 = vadd.f32 %v2268, %v2274
        %2277 = vst.msk [vmem:[%s323] sm:$0xff] %vm340, %v2276
        %s2278 = sand.u32 %s225, 1
        %s2279 = scalar_lea.sflag [#allocation3], %s2278
        %s2280 = sand.u32 %s225, 1
        %s2281 = smul.addr %s2280, 8
        %s2282 = scalar_lea.vmem [#allocation2], %s2281
        // Predicated region
        $region57: #{tpu_custom_call.1} parent=55 // pred_check
          %p2283 = pneg %p235
        $region58: #{tpu_custom_call.1} parent=55 // pred_check_branch
          %2285 = sbr.rel (%p2283) target = $region60
        $region59: #{tpu_custom_call.1} parent=55 // pred_region
          %s2287 = ssub.s32 128, 128
          %2288 = vsyncadd %s2279, %s2287
          %s2289 = smul.addr %s23, 128
          %s2290 = scalar_lea.hbm %s9, %s2289
          %s2292 = sshll.u32 %s2282, 4
          %s2293 = int_to_ptr.vmem [resolvable:$true] %s2292
          %2295 = dma.vmem_to_hbm [thread:$0]  %s2293, 128, %s2290, %s2279
        $region60: #{tpu_custom_call.1} parent=55 // pred_fallthru
          _
      $region56: #{tpu_custom_call.1} parent=5 // pred_fallthru
        _
      %p2296 = scmp.le.s32.totalorder 2, %s18
      // Predicated region
      $region61: #{tpu_custom_call.1} parent=5 // pred_check
        %p2297 = pneg %p2296
      $region62: #{tpu_custom_call.1} parent=5 // pred_check_branch
        %2299 = sbr.rel (%p2297) target = $region64
      $region63: #{tpu_custom_call.1} parent=5 // pred_region
        %s2300 = ssub.s32 %s18, 2
        // Predicated region
        $region65: #{tpu_custom_call.1} parent=63 // pred_check
          %p2301 = pneg %p241
        $region66: #{tpu_custom_call.1} parent=63 // pred_check_branch
          %2303 = sbr.rel (%p2301) target = $region68
        $region67: #{tpu_custom_call.1} parent=63 // pred_region
          %s2304 = sand.u32 %s226, 1
          %s2305 = scalar_lea.sflag [#allocation3], %s2304
          %s2306 = sand.u32 %s226, 1
          %s2307 = smul.addr %s2306, 8
          %s2308 = scalar_lea.vmem [#allocation2], %s2307
          %2309 = dma.done %s2305, 128
        $region68: #{tpu_custom_call.1} parent=63 // pred_fallthru
          _
      $region64: #{tpu_custom_call.1} parent=5 // pred_fallthru
        _
    $region6: #{tpu_custom_call.1} parent=1 // loop_footer
      %s22 = sadd.s32 1, %s18
    $region7: #{tpu_custom_call.1} parent=1 // loop_footer_branch
      %17 = sbr.rel target = $region3
    $region8: #{tpu_custom_call.1} parent=1 // loop_exit
      _
    %2310 = vsyncpa [#allocation3], 1
    %s2311 = scalar_lea.sflag [#allocation3], 1
    %2312 = vsyncpa %s2311, 1

</llo_original>
